<compile_context>
chip_gen: v7x
topology: tpu7x:2x2x1
jax: 0.10.0
libtpu: 0.0.40
codegen_flags: <defaults>
</compile_context>

<pallas_src>
import functools

import jax
import jax.numpy as jnp
from jax import lax
from jax.experimental import pallas as pl
from jax.experimental.pallas import tpu as pltpu


def _conv_bn_relu_kernel(x_ref, w_ref, b_ref, o_ref, *, k, dil, wp):
    """Single-invocation fused 3x3-dilated-conv + BN(eval) + ReLU.

    x_ref: (Cin_pad, N*Hp*Wp + maxoff)  padded input, batch folded into lanes
    w_ref: (K*K, Cout, Cin_pad)         BN-scale-folded weights, one slab per tap
    b_ref: (Cout, 1)                    folded BN bias = beta - mean*gamma/sqrt(var+eps)
    o_ref: (Cout, N*Hp*Wp)              output on the padded spatial canvas
    """
    cout, l = o_ref.shape
    acc = None
    for kh in range(k):
        for kw in range(k):
            tap = kh * k + kw
            off = kh * dil * wp + kw * dil          # static lane offset of this tap
            term = jnp.dot(w_ref[tap], x_ref[:, off:off + l],
                           preferred_element_type=jnp.float32)   # MXU
            acc = term if acc is None else acc + term
    o_ref[...] = jnp.maximum(acc + b_ref[...], 0.0)              # bias + ReLU (VPU)


def fold_conv_bn(weight_oihw, gamma, beta, run_mean, run_var, *, eps=1e-5):
    """Fold eval-mode BN into the conv weights/bias.  Call ONCE (weights and
    running stats are static in eval), outside the jitted per-call path."""
    cout, cin, k, _ = weight_oihw.shape
    cin_pad = ((cin + 7) // 8) * 8                  # align contraction dim to sublanes
    scale = gamma / jnp.sqrt(run_var + eps)
    bias = beta - run_mean * scale
    # (K, K, Cout, Cin): w_taps[kh*K+kw, co, ci] == weight[co, ci, kh, kw] * scale[co]
    w_taps = weight_oihw.transpose(2, 3, 0, 1).reshape(k * k, cout, cin)
    w_taps = (w_taps * scale[None, :, None]).astype(jnp.float32)
    w_taps = jnp.pad(w_taps, ((0, 0), (0, 0), (0, cin_pad - cin)))
    return w_taps, bias.reshape(cout, 1).astype(jnp.float32)


@functools.partial(jax.jit, static_argnames=("sel_index",))
def conv_mode_forward(x_nchw, w_taps, bias2d, *, sel_index=1):
    """ConvMode(mode=0, stride=1).forward (eval-mode BN) for an NCHW input."""
    n, cin, h, w = x_nchw.shape
    kk, cout, cin_pad = w_taps.shape
    k = int(round(kk ** 0.5))
    d = sel_index
    hp, wp = h + 2 * d, w + 2 * d
    l = n * hp * wp                                  # canvas length (free dim)
    maxoff = (k - 1) * d * wp + (k - 1) * d          # largest tap lane offset

    # Compact input slab: (Cin_pad, N*Hp*Wp + maxoff), ~1x the input (no 9x im2col).
    xp = jnp.pad(x_nchw.astype(jnp.float32), ((0, 0), (0, 0), (d, d), (d, d)))
    xf = xp.transpose(1, 0, 2, 3).reshape(cin, l)
    xf = jnp.pad(xf, ((0, cin_pad - cin), (0, maxoff)))

    kernel = functools.partial(_conv_bn_relu_kernel, k=k, dil=d, wp=wp)
    canvas = pl.pallas_call(
        kernel,
        out_shape=jax.ShapeDtypeStruct((cout, l), jnp.float32),
        # No grid: one step, whole (tiny) arrays resident in VMEM.
        in_specs=[pl.BlockSpec(memory_space=pltpu.MemorySpace.VMEM)] * 3,
        out_specs=pl.BlockSpec(memory_space=pltpu.MemorySpace.VMEM),
        compiler_params=pltpu.CompilerParams(
            # Fuse the tiny pad/transpose producer of xf into the pallas operand.
            allow_input_fusion=[True, False, False],
            # Working set is <0.1 MiB; no vmem_limit_bytes needed on any gen.
        ),
    )(xf, w_taps, bias2d)

    # Crop the padded canvas and un-batch: (Cout, N, Hp, Wp) -> (N, Cout, H, W).
    out = canvas.reshape(cout, n, hp, wp)[:, :, :h, :w]
    return out.transpose(1, 0, 2, 3)


def _reference(x_nchw, weight_oihw, gamma, beta, run_mean, run_var,
               *, sel_index=1, eps=1e-5):
    """Pure-JAX (lax) reference of the same forward pass."""
    conv = lax.conv_general_dilated(
        x_nchw, weight_oihw,
        window_strides=(1, 1),
        padding=[(sel_index, sel_index), (sel_index, sel_index)],
        rhs_dilation=(sel_index, sel_index),
        dimension_numbers=("NCHW", "OIHW", "NCHW"),
        precision=lax.Precision.HIGHEST)
    scale = (gamma / jnp.sqrt(run_var + eps)).reshape(1, -1, 1, 1)
    bias = (beta - run_mean * gamma / jnp.sqrt(run_var + eps)).reshape(1, -1, 1, 1)
    return jnp.maximum(conv * scale + bias, 0.0)


if __name__ == "__main__":
    key = jax.random.PRNGKey(0)
    k0, k1, k2, k3, k4, k5 = jax.random.split(key, 6)

    # ConvMode(mode=0, ipc=4, opc=8, sel_index=1, stride=1)
    N, Cin, H, W = 2, 4, 16, 16
    Cout, K = 8, 3
    sel_index = 1

    x = jax.random.normal(k0, (N, Cin, H, W), dtype=jnp.float32)
    weight = jax.random.normal(k1, (Cout, Cin, K, K), dtype=jnp.float32) * 0.1
    gamma = 1.0 + 0.1 * jax.random.normal(k2, (Cout,), dtype=jnp.float32)
    beta = 0.1 * jax.random.normal(k3, (Cout,), dtype=jnp.float32)
    run_mean = 0.1 * jax.random.normal(k4, (Cout,), dtype=jnp.float32)
    run_var = jnp.abs(jax.random.normal(k5, (Cout,), dtype=jnp.float32)) + 0.5

    # Static eval-mode BN fold, hoisted out of the per-call path.
    w_taps, bias2d = fold_conv_bn(weight, gamma, beta, run_mean, run_var)

    out = conv_mode_forward(x, w_taps, bias2d, sel_index=sel_index)
    out = jax.block_until_ready(out)

    ref = _reference(x, weight, gamma, beta, run_mean, run_var,
                     sel_index=sel_index)
    assert out.shape == (N, Cout, H, W)
    assert jnp.allclose(out, ref, atol=1e-4, rtol=1e-4), "mismatch vs reference"

    print("KERNEL_OK")
</pallas_src>

<mosaic_0001>
module attributes {stable_mosaic.version = 11 : i64} {
  func.func @_conv_bn_relu_kernel(%arg0: memref<8x686xf32, #tpu.memory_space<vmem>>, %arg1: memref<9x8x8xf32, #tpu.memory_space<vmem>>, %arg2: memref<8x1xf32, #tpu.memory_space<vmem>>, %arg3: memref<8x648xf32, #tpu.memory_space<vmem>>) attributes {dimension_semantics = [], scalar_prefetch = 0 : i64, scratch_operands = 0 : i64, tpu.core_type = #tpu.core_type<tc>} {
    %c0 = arith.constant 0 : index
    %c0_0 = arith.constant 0 : index
    %c0_1 = arith.constant 0 : index
    %0 = vector.load %arg1[%c0, %c0_0, %c0_1] : memref<9x8x8xf32, #tpu.memory_space<vmem>>, vector<1x8x8xf32>
    %1 = vector.shape_cast %0 : vector<1x8x8xf32> to vector<8x8xf32>
    %c0_2 = arith.constant 0 : index
    %c0_3 = arith.constant 0 : index
    %2 = vector.load %arg0[%c0_2, %c0_3] : memref<8x686xf32, #tpu.memory_space<vmem>>, vector<8x648xf32>
    %cst = arith.constant dense<0.000000e+00> : vector<8x648xf32>
    %3 = tpu.matmul %1, %2, %cst {dimension_numbers = #tpu.dot_dimension_numbers<[1], [0], [0], [1], [0, 0, 1, 1], [], []>} : vector<8x8xf32>, vector<8x648xf32>, vector<8x648xf32> -> vector<8x648xf32>
    %c1 = arith.constant 1 : index
    %c0_4 = arith.constant 0 : index
    %c0_5 = arith.constant 0 : index
    %4 = vector.load %arg1[%c1, %c0_4, %c0_5] : memref<9x8x8xf32, #tpu.memory_space<vmem>>, vector<1x8x8xf32>
    %5 = vector.shape_cast %4 : vector<1x8x8xf32> to vector<8x8xf32>
    %c0_6 = arith.constant 0 : index
    %c1_7 = arith.constant 1 : index
    %6 = vector.load %arg0[%c0_6, %c1_7] : memref<8x686xf32, #tpu.memory_space<vmem>>, vector<8x648xf32>
    %cst_8 = arith.constant dense<0.000000e+00> : vector<8x648xf32>
    %7 = tpu.matmul %5, %6, %cst_8 {dimension_numbers = #tpu.dot_dimension_numbers<[1], [0], [0], [1], [0, 0, 1, 1], [], []>} : vector<8x8xf32>, vector<8x648xf32>, vector<8x648xf32> -> vector<8x648xf32>
    %8 = arith.addf %3, %7 : vector<8x648xf32>
    %c2 = arith.constant 2 : index
    %c0_9 = arith.constant 0 : index
    %c0_10 = arith.constant 0 : index
    %9 = vector.load %arg1[%c2, %c0_9, %c0_10] : memref<9x8x8xf32, #tpu.memory_space<vmem>>, vector<1x8x8xf32>
    %10 = vector.shape_cast %9 : vector<1x8x8xf32> to vector<8x8xf32>
    %c0_11 = arith.constant 0 : index
    %c2_12 = arith.constant 2 : index
    %11 = vector.load %arg0[%c0_11, %c2_12] : memref<8x686xf32, #tpu.memory_space<vmem>>, vector<8x648xf32>
    %cst_13 = arith.constant dense<0.000000e+00> : vector<8x648xf32>
    %12 = tpu.matmul %10, %11, %cst_13 {dimension_numbers = #tpu.dot_dimension_numbers<[1], [0], [0], [1], [0, 0, 1, 1], [], []>} : vector<8x8xf32>, vector<8x648xf32>, vector<8x648xf32> -> vector<8x648xf32>
    %13 = arith.addf %8, %12 : vector<8x648xf32>
    %c3 = arith.constant 3 : index
    %c0_14 = arith.constant 0 : index
    %c0_15 = arith.constant 0 : index
    %14 = vector.load %arg1[%c3, %c0_14, %c0_15] : memref<9x8x8xf32, #tpu.memory_space<vmem>>, vector<1x8x8xf32>
    %15 = vector.shape_cast %14 : vector<1x8x8xf32> to vector<8x8xf32>
    %c0_16 = arith.constant 0 : index
    %c18 = arith.constant 18 : index
    %16 = vector.load %arg0[%c0_16, %c18] : memref<8x686xf32, #tpu.memory_space<vmem>>, vector<8x648xf32>
    %cst_17 = arith.constant dense<0.000000e+00> : vector<8x648xf32>
    %17 = tpu.matmul %15, %16, %cst_17 {dimension_numbers = #tpu.dot_dimension_numbers<[1], [0], [0], [1], [0, 0, 1, 1], [], []>} : vector<8x8xf32>, vector<8x648xf32>, vector<8x648xf32> -> vector<8x648xf32>
    %18 = arith.addf %13, %17 : vector<8x648xf32>
    %c4 = arith.constant 4 : index
    %c0_18 = arith.constant 0 : index
    %c0_19 = arith.constant 0 : index
    %19 = vector.load %arg1[%c4, %c0_18, %c0_19] : memref<9x8x8xf32, #tpu.memory_space<vmem>>, vector<1x8x8xf32>
    %20 = vector.shape_cast %19 : vector<1x8x8xf32> to vector<8x8xf32>
    %c0_20 = arith.constant 0 : index
    %c19 = arith.constant 19 : index
    %21 = vector.load %arg0[%c0_20, %c19] : memref<8x686xf32, #tpu.memory_space<vmem>>, vector<8x648xf32>
    %cst_21 = arith.constant dense<0.000000e+00> : vector<8x648xf32>
    %22 = tpu.matmul %20, %21, %cst_21 {dimension_numbers = #tpu.dot_dimension_numbers<[1], [0], [0], [1], [0, 0, 1, 1], [], []>} : vector<8x8xf32>, vector<8x648xf32>, vector<8x648xf32> -> vector<8x648xf32>
    %23 = arith.addf %18, %22 : vector<8x648xf32>
    %c5 = arith.constant 5 : index
    %c0_22 = arith.constant 0 : index
    %c0_23 = arith.constant 0 : index
    %24 = vector.load %arg1[%c5, %c0_22, %c0_23] : memref<9x8x8xf32, #tpu.memory_space<vmem>>, vector<1x8x8xf32>
    %25 = vector.shape_cast %24 : vector<1x8x8xf32> to vector<8x8xf32>
    %c0_24 = arith.constant 0 : index
    %c20 = arith.constant 20 : index
    %26 = vector.load %arg0[%c0_24, %c20] : memref<8x686xf32, #tpu.memory_space<vmem>>, vector<8x648xf32>
    %cst_25 = arith.constant dense<0.000000e+00> : vector<8x648xf32>
    %27 = tpu.matmul %25, %26, %cst_25 {dimension_numbers = #tpu.dot_dimension_numbers<[1], [0], [0], [1], [0, 0, 1, 1], [], []>} : vector<8x8xf32>, vector<8x648xf32>, vector<8x648xf32> -> vector<8x648xf32>
    %28 = arith.addf %23, %27 : vector<8x648xf32>
    %c6 = arith.constant 6 : index
    %c0_26 = arith.constant 0 : index
    %c0_27 = arith.constant 0 : index
    %29 = vector.load %arg1[%c6, %c0_26, %c0_27] : memref<9x8x8xf32, #tpu.memory_space<vmem>>, vector<1x8x8xf32>
    %30 = vector.shape_cast %29 : vector<1x8x8xf32> to vector<8x8xf32>
    %c0_28 = arith.constant 0 : index
    %c36 = arith.constant 36 : index
    %31 = vector.load %arg0[%c0_28, %c36] : memref<8x686xf32, #tpu.memory_space<vmem>>, vector<8x648xf32>
    %cst_29 = arith.constant dense<0.000000e+00> : vector<8x648xf32>
    %32 = tpu.matmul %30, %31, %cst_29 {dimension_numbers = #tpu.dot_dimension_numbers<[1], [0], [0], [1], [0, 0, 1, 1], [], []>} : vector<8x8xf32>, vector<8x648xf32>, vector<8x648xf32> -> vector<8x648xf32>
    %33 = arith.addf %28, %32 : vector<8x648xf32>
    %c7 = arith.constant 7 : index
    %c0_30 = arith.constant 0 : index
    %c0_31 = arith.constant 0 : index
    %34 = vector.load %arg1[%c7, %c0_30, %c0_31] : memref<9x8x8xf32, #tpu.memory_space<vmem>>, vector<1x8x8xf32>
    %35 = vector.shape_cast %34 : vector<1x8x8xf32> to vector<8x8xf32>
    %c0_32 = arith.constant 0 : index
    %c37 = arith.constant 37 : index
    %36 = vector.load %arg0[%c0_32, %c37] : memref<8x686xf32, #tpu.memory_space<vmem>>, vector<8x648xf32>
    %cst_33 = arith.constant dense<0.000000e+00> : vector<8x648xf32>
    %37 = tpu.matmul %35, %36, %cst_33 {dimension_numbers = #tpu.dot_dimension_numbers<[1], [0], [0], [1], [0, 0, 1, 1], [], []>} : vector<8x8xf32>, vector<8x648xf32>, vector<8x648xf32> -> vector<8x648xf32>
    %38 = arith.addf %33, %37 : vector<8x648xf32>
    %c8 = arith.constant 8 : index
    %c0_34 = arith.constant 0 : index
    %c0_35 = arith.constant 0 : index
    %39 = vector.load %arg1[%c8, %c0_34, %c0_35] : memref<9x8x8xf32, #tpu.memory_space<vmem>>, vector<1x8x8xf32>
    %40 = vector.shape_cast %39 : vector<1x8x8xf32> to vector<8x8xf32>
    %c0_36 = arith.constant 0 : index
    %c38 = arith.constant 38 : index
    %41 = vector.load %arg0[%c0_36, %c38] : memref<8x686xf32, #tpu.memory_space<vmem>>, vector<8x648xf32>
    %cst_37 = arith.constant dense<0.000000e+00> : vector<8x648xf32>
    %42 = tpu.matmul %40, %41, %cst_37 {dimension_numbers = #tpu.dot_dimension_numbers<[1], [0], [0], [1], [0, 0, 1, 1], [], []>} : vector<8x8xf32>, vector<8x648xf32>, vector<8x648xf32> -> vector<8x648xf32>
    %43 = arith.addf %38, %42 : vector<8x648xf32>
    %c0_38 = arith.constant 0 : index
    %c0_39 = arith.constant 0 : index
    %44 = vector.load %arg2[%c0_38, %c0_39] : memref<8x1xf32, #tpu.memory_space<vmem>>, vector<8x1xf32>
    %45 = vector.broadcast %44 : vector<8x1xf32> to vector<8x648xf32>
    %46 = arith.addf %43, %45 : vector<8x648xf32>
    %cst_40 = arith.constant 0.000000e+00 : f32
    %47 = vector.broadcast %cst_40 : f32 to vector<8x648xf32>
    %48 = arith.maximumf %46, %47 : vector<8x648xf32>
    %c0_41 = arith.constant 0 : index
    %c0_42 = arith.constant 0 : index
    %49 = vector.load %arg3[%c0_41, %c0_42] : memref<8x648xf32, #tpu.memory_space<vmem>>, vector<8x648xf32>
    tpu.vector_store %arg3[%c0_41, %c0_42], %48 {strides = array<i32>} : memref<8x648xf32, #tpu.memory_space<vmem>>, vector<8x648xf32>,
    return
  }
}

</mosaic_0001>

<llo_original>
// kernel: conv_mode_forward.2
$region0: #{conv_mode_forward.2}
  #allocation0 [shape = 'u32[]', space=smem, size = 0x4, offset = 0x4, fixed_abs, tag = 'smem constant byte address 0x4 - core index']
  #allocation1 [shape = 'u32[144,128]{1,0:T(1,128)}', space=vmem, size = 0x12000, scoped, tag = 'internal scratch']
  #allocation2 [shape = 'u32[2048]{0}', space=vmem, size = 0x2000, scoped, tag = 'scoped memory for conv_mode_forward.2']
  #allocation3 [shape = 'u32[2048]{0}', space=vmem, size = 0x2000, scoped, tag = 'scoped memory for conv_mode_forward.2']
  #allocation4 [shape = 'u32[2048]{0}', space=vmem, size = 0x2000, scoped, tag = 'scoped memory for conv_mode_forward.2']
  #allocation5 [shape = 'u32[2048]{0}', space=vmem, size = 0x2000, scoped, tag = 'scoped memory for conv_mode_forward.2']
  #allocation6 [shape = 'u32[2048]{0}', space=vmem, size = 0x2000, scoped, tag = 'scoped memory for conv_mode_forward.2']
  %s0 = inlined_call_operand.vmem [shape: f32[9,8,8], index: 0, kind: input, shape index: {}]
  %s1 = inlined_call_operand.vmem [shape: f32[8,1], index: 1, kind: input, shape index: {}]
  %s2 = inlined_call_operand.vmem [shape: f32[4,648], index: 2, kind: input, shape index: {}]
  %s3 = inlined_call_operand.<no memory space> [shape: f32[], index: 3, kind: input, shape index: {}]
  %s4 = inlined_call_operand.vmem [shape: f32[8,648], index: 4, kind: output, shape index: {}]
  %s5 = sld [smem:[#allocation0]]
  $region22: #{conv_mode_forward.2} parent=0
    _
  %s7 = ssub.s32 1, %s5
  %s8 = scalar_select 0, %s7, %s5
  %v9 = vstv %s3
  $region1: #{conv_mode_forward.2} parent=0
    #allocation7 [shape = 'u8[24576]{0}', space=vmem, size = 0x6000, dematerialized = true, scoped, tag = 'FusionAdapter Buffer %fusion.1 = f32[8,686]{1,0:T(8,128)} fusion(%param_2.1, %param_3), kind=kLoop, calls=%fused_computation.3.clone, metadata={op_name="jit(conv_mode_forward)/jit(_pad)/pad" stack_frame_id=9}']
    // Predicated region
    $region2: #{conv_mode_forward.2} parent=1 // pred_check
      _
    $region3: #{conv_mode_forward.2} parent=1 // pred_check_branch
      %11 = sbr.rel (0) target = $region5
    $region4: #{conv_mode_forward.2} parent=1 // pred_region
      _
    $region5: #{conv_mode_forward.2} parent=1 // pred_fallthru
      _
    // Predicated region
    $region6: #{conv_mode_forward.2} parent=1 // pred_check
      _
    $region7: #{conv_mode_forward.2} parent=1 // pred_check_branch
      %13 = sbr.rel (0) target = $region9
    $region8: #{conv_mode_forward.2} parent=1 // pred_region
      _
    $region9: #{conv_mode_forward.2} parent=1 // pred_fallthru
      _
    // Predicated region
    $region10: #{conv_mode_forward.2} parent=1 // pred_check
      _
    $region11: #{conv_mode_forward.2} parent=1 // pred_check_branch
      %15 = sbr.rel (0) target = $region13
    $region12: #{conv_mode_forward.2} parent=1 // pred_region
      _
    $region13: #{conv_mode_forward.2} parent=1 // pred_fallthru
      _
    %v16 = vld [vmem:[%s2] sm:$0xf]
    %v17 = vlaneseq
    %v18 = vshrl.u32 %v17, 7
    %vm20 = vcmp.lt.s32.totalorder %v18, 4
    %v21 = vsel %vm20, %v16, %v9
    %v22 = vlaneseq
    %v23 = vand.u32 %v22, 127
    %vm25 = vcmp.lt.s32.totalorder %v23, 648
    %v26 = vsel %vm25, %v21, %v9
    %28 = vst [vmem:[#allocation7] sm:$0xff] %v26
    %s29 = scalar_lea.vmem %s2, 4
    %v30 = vld [vmem:[%s29] sm:$0xf]
    %v31 = vlaneseq
    %v32 = vshrl.u32 %v31, 7
    %vm34 = vcmp.lt.s32.totalorder %v32, 4
    %v35 = vsel %vm34, %v30, %v9
    %v36 = vlaneseq
    %v37 = vand.u32 %v36, 127
    %v38 = vadd.s32 %v37, 128
    %vm39 = vcmp.lt.s32.totalorder %v38, 648
    %v40 = vsel %vm39, %v35, %v9
    %s41 = scalar_lea.vmem [#allocation7], 8
    %43 = vst [vmem:[%s41] sm:$0xff] %v40
    %s44 = scalar_lea.vmem %s2, 8
    %v45 = vld [vmem:[%s44] sm:$0xf]
    %v46 = vlaneseq
    %v47 = vshrl.u32 %v46, 7
    %vm49 = vcmp.lt.s32.totalorder %v47, 4
    %v50 = vsel %vm49, %v45, %v9
    %v51 = vlaneseq
    %v52 = vand.u32 %v51, 127
    %v53 = vadd.s32 %v52, 256
    %vm54 = vcmp.lt.s32.totalorder %v53, 648
    %v55 = vsel %vm54, %v50, %v9
    %s56 = scalar_lea.vmem [#allocation7], 16
    %58 = vst [vmem:[%s56] sm:$0xff] %v55
    %s59 = scalar_lea.vmem %s2, 12
    %v60 = vld [vmem:[%s59] sm:$0xf]
    %v61 = vlaneseq
    %v62 = vshrl.u32 %v61, 7
    %vm64 = vcmp.lt.s32.totalorder %v62, 4
    %v65 = vsel %vm64, %v60, %v9
    %v66 = vlaneseq
    %v67 = vand.u32 %v66, 127
    %v68 = vadd.s32 %v67, 384
    %vm69 = vcmp.lt.s32.totalorder %v68, 648
    %v70 = vsel %vm69, %v65, %v9
    %s71 = scalar_lea.vmem [#allocation7], 24
    %73 = vst [vmem:[%s71] sm:$0xff] %v70
    %s74 = scalar_lea.vmem %s2, 16
    %v75 = vld [vmem:[%s74] sm:$0xf]
    %v76 = vlaneseq
    %v77 = vshrl.u32 %v76, 7
    %vm79 = vcmp.lt.s32.totalorder %v77, 4
    %v80 = vsel %vm79, %v75, %v9
    %v81 = vlaneseq
    %v82 = vand.u32 %v81, 127
    %v83 = vadd.s32 %v82, 512
    %vm84 = vcmp.lt.s32.totalorder %v83, 648
    %v85 = vsel %vm84, %v80, %v9
    %s86 = scalar_lea.vmem [#allocation7], 32
    %88 = vst [vmem:[%s86] sm:$0xff] %v85
    %s89 = scalar_lea.vmem %s2, 20
    %v90 = vld [vmem:[%s89] sm:$0xf]
    %v91 = vlaneseq
    %v92 = vshrl.u32 %v91, 7
    %vm94 = vcmp.lt.s32.totalorder %v92, 4
    %v95 = vsel %vm94, %v90, %v9
    %v96 = vlaneseq
    %v97 = vand.u32 %v96, 127
    %v98 = vadd.s32 %v97, 640
    %vm99 = vcmp.lt.s32.totalorder %v98, 648
    %v100 = vsel %vm99, %v95, %v9
    %s101 = scalar_lea.vmem [#allocation7], 40
    %103 = vst [vmem:[%s101] sm:$0xff] %v100
    %v104 = vld [vmem:[%s0] sm:$0xff]
    %v105 = vld [vmem:[#allocation7] sm:$0xff]
    %v106 = vld [vmem:[#allocation7 + $0x8] sm:$0xff]
    %v107 = vld [vmem:[#allocation7 + $0x10] sm:$0xff]
    %v108 = vld [vmem:[#allocation7 + $0x18] sm:$0xff]
    %v109 = vld [vmem:[#allocation7 + $0x20] sm:$0xff]
    %v110 = vld [vmem:[#allocation7 + $0x28] sm:$0xff]
    %s111 = scalar_lea.vmem %s0, 8
    %v112 = vld [vmem:[%s111] sm:$0xff]
    %119 = vrot.lane.b32.xlu0 %v105, 127
    %v120 = vpop.permute.xlu0 %119
    %121 = vrot.lane.b32.xlu0 %v106, 127
    %v122 = vpop.permute.xlu0 %121
    %123 = vrot.lane.b32.xlu0 %v107, 127
    %v124 = vpop.permute.xlu0 %123
    %125 = vrot.lane.b32.xlu0 %v108, 127
    %v126 = vpop.permute.xlu0 %125
    %127 = vrot.lane.b32.xlu0 %v109, 127
    %v128 = vpop.permute.xlu0 %127
    %129 = vrot.lane.b32.xlu0 %v110, 127
    %v130 = vpop.permute.xlu0 %129
    %vm131 = vcmask 1039360
    %v132 = vsel %vm131, %v120, %v122
    %v133 = vsel %vm131, %v122, %v124
    %v134 = vsel %vm131, %v124, %v126
    %v135 = vsel %vm131, %v126, %v128
    %v136 = vsel %vm131, %v128, %v130
    %vm143 = vcmask 64512
    %v145 = vsel %vm143, %v112, 0
    %147 = vmatprep.subr.mxu0 %v133
    %148 = vmatpush1.msra.mxu0 %v132
    %149 = vmatprep.subr.mxu0 0.0
    %150 = vmatpush1.msra.mxu0 0.0
    %151 = vmatprep.subr.mxu0 0.0
    %152 = vmatpush1.msra.mxu0 0.0
    %153 = vmatprep.subr.mxu0 0.0
    %154 = vmatpush1.msra.mxu0 0.0
    %155 = vmatprep.subr.mxu0 0.0
    %156 = vmatpush1.msra.mxu0 0.0
    %157 = vmatprep.subr.mxu0 0.0
    %158 = vmatpush1.msra.mxu0 0.0
    %159 = vmatprep.subr.mxu0 0.0
    %160 = vmatpush1.msra.mxu0 0.0
    %161 = vmatprep.subr.mxu0 0.0
    %162 = vmatpush1.msra.mxu0 0.0
    %163 = vmatprep.subr.mxu0 0.0
    %164 = vmatpush1.msra.mxu0 0.0
    %165 = vmatprep.subr.mxu0 0.0
    %166 = vmatpush1.msra.mxu0 0.0
    %167 = vmatprep.subr.mxu0 0.0
    %168 = vmatpush1.msra.mxu0 0.0
    %169 = vmatprep.subr.mxu0 0.0
    %170 = vmatpush1.msra.mxu0 0.0
    %171 = vmatprep.subr.mxu0 0.0
    %172 = vmatpush1.msra.mxu0 0.0
    %173 = vmatprep.subr.mxu0 0.0
    %174 = vmatpush1.msra.mxu0 0.0
    %175 = vmatprep.subr.mxu0 0.0
    %176 = vmatpush1.msra.mxu0 0.0
    %177 = vmatprep.subr.mxu0 0.0
    %178 = vmatpush1.msra.mxu0 0.0
    %179 = vmatprep.subr.mxu0 0.0
    %180 = vmatpush1.msra.mxu0 0.0
    %181 = vmatprep.subr.mxu0 0.0
    %182 = vmatpush1.msra.mxu0 0.0
    %183 = vmatprep.subr.mxu0 0.0
    %184 = vmatpush1.msra.mxu0 0.0
    %185 = vmatprep.subr.mxu0 0.0
    %186 = vmatpush1.msra.mxu0 0.0
    %187 = vmatprep.subr.mxu0 0.0
    %188 = vmatpush1.msra.mxu0 0.0
    %189 = vmatprep.subr.mxu0 0.0
    %190 = vmatpush1.msra.mxu0 0.0
    %191 = vmatprep.subr.mxu0 0.0
    %192 = vmatpush1.msra.mxu0 0.0
    %193 = vmatprep.subr.mxu0 0.0
    %194 = vmatpush1.msra.mxu0 0.0
    %195 = vmatprep.subr.mxu0 0.0
    %196 = vmatpush1.msra.mxu0 0.0
    %197 = vmatprep.subr.mxu0 0.0
    %198 = vmatpush1.msra.mxu0 0.0
    %199 = vmatprep.subr.mxu0 0.0
    %200 = vmatpush1.msra.mxu0 0.0
    %201 = vmatprep.subr.mxu0 0.0
    %202 = vmatpush1.msra.mxu0 0.0
    %203 = vmatprep.subr.mxu0 0.0
    %204 = vmatpush1.msra.mxu0 0.0
    %205 = vmatprep.subr.mxu0 0.0
    %206 = vmatpush1.msra.mxu0 0.0
    %207 = vmatprep.subr.mxu0 0.0
    %208 = vmatpush1.msra.mxu0 0.0
    %209 = vmatprep.subr.mxu0 0.0
    %210 = vmatpush1.msra.mxu0 0.0
    %211 = vmatprep.mubr.f32.mxu0 0.0
    %212 = vmatmul.mubr.f32.gmra.mrb[0].mxu0 %v145
    %v213 = vpop.f32.mrb[0].mxu0
    %v214 = vadd.f32 0.0, %v213
    %v215 = vpop.f32.mrb[0].mxu0
    %v216 = vadd.f32 0.0, %v215
    %217 = vdwg.mxu0
    %218 = vmatprep.subr.mxu0 %v135
    %219 = vmatpush1.msra.mxu0 %v134
    %220 = vmatprep.subr.mxu0 0.0
    %221 = vmatpush1.msra.mxu0 0.0
    %222 = vmatprep.subr.mxu0 0.0
    %223 = vmatpush1.msra.mxu0 0.0
    %224 = vmatprep.subr.mxu0 0.0
    %225 = vmatpush1.msra.mxu0 0.0
    %226 = vmatprep.subr.mxu0 0.0
    %227 = vmatpush1.msra.mxu0 0.0
    %228 = vmatprep.subr.mxu0 0.0
    %229 = vmatpush1.msra.mxu0 0.0
    %230 = vmatprep.subr.mxu0 0.0
    %231 = vmatpush1.msra.mxu0 0.0
    %232 = vmatprep.subr.mxu0 0.0
    %233 = vmatpush1.msra.mxu0 0.0
    %234 = vmatprep.subr.mxu0 0.0
    %235 = vmatpush1.msra.mxu0 0.0
    %236 = vmatprep.subr.mxu0 0.0
    %237 = vmatpush1.msra.mxu0 0.0
    %238 = vmatprep.subr.mxu0 0.0
    %239 = vmatpush1.msra.mxu0 0.0
    %240 = vmatprep.subr.mxu0 0.0
    %241 = vmatpush1.msra.mxu0 0.0
    %242 = vmatprep.subr.mxu0 0.0
    %243 = vmatpush1.msra.mxu0 0.0
    %244 = vmatprep.subr.mxu0 0.0
    %245 = vmatpush1.msra.mxu0 0.0
    %246 = vmatprep.subr.mxu0 0.0
    %247 = vmatpush1.msra.mxu0 0.0
    %248 = vmatprep.subr.mxu0 0.0
    %249 = vmatpush1.msra.mxu0 0.0
    %250 = vmatprep.subr.mxu0 0.0
    %251 = vmatpush1.msra.mxu0 0.0
    %252 = vmatprep.subr.mxu0 0.0
    %253 = vmatpush1.msra.mxu0 0.0
    %254 = vmatprep.subr.mxu0 0.0
    %255 = vmatpush1.msra.mxu0 0.0
    %256 = vmatprep.subr.mxu0 0.0
    %257 = vmatpush1.msra.mxu0 0.0
    %258 = vmatprep.subr.mxu0 0.0
    %259 = vmatpush1.msra.mxu0 0.0
    %260 = vmatprep.subr.mxu0 0.0
    %261 = vmatpush1.msra.mxu0 0.0
    %262 = vmatprep.subr.mxu0 0.0
    %263 = vmatpush1.msra.mxu0 0.0
    %264 = vmatprep.subr.mxu0 0.0
    %265 = vmatpush1.msra.mxu0 0.0
    %266 = vmatprep.subr.mxu0 0.0
    %267 = vmatpush1.msra.mxu0 0.0
    %268 = vmatprep.subr.mxu0 0.0
    %269 = vmatpush1.msra.mxu0 0.0
    %270 = vmatprep.subr.mxu0 0.0
    %271 = vmatpush1.msra.mxu0 0.0
    %272 = vmatprep.subr.mxu0 0.0
    %273 = vmatpush1.msra.mxu0 0.0
    %274 = vmatprep.subr.mxu0 0.0
    %275 = vmatpush1.msra.mxu0 0.0
    %276 = vmatprep.subr.mxu0 0.0
    %277 = vmatpush1.msra.mxu0 0.0
    %278 = vmatprep.subr.mxu0 0.0
    %279 = vmatpush1.msra.mxu0 0.0
    %280 = vmatprep.subr.mxu0 0.0
    %281 = vmatpush1.msra.mxu0 0.0
    %282 = vmatprep.mubr.f32.mxu0 0.0
    %283 = vmatmul.mubr.f32.gmra.mrb[0].mxu0 %v145
    %v284 = vpop.f32.mrb[0].mxu0
    %v285 = vadd.f32 0.0, %v284
    %v286 = vpop.f32.mrb[0].mxu0
    %v287 = vadd.f32 0.0, %v286
    %288 = vdwg.mxu0
    %289 = vmatprep.subr.mxu0 %v130
    %290 = vmatpush1.msra.mxu0 %v136
    %291 = vmatprep.subr.mxu0 0.0
    %292 = vmatpush1.msra.mxu0 0.0
    %293 = vmatprep.subr.mxu0 0.0
    %294 = vmatpush1.msra.mxu0 0.0
    %295 = vmatprep.subr.mxu0 0.0
    %296 = vmatpush1.msra.mxu0 0.0
    %297 = vmatprep.subr.mxu0 0.0
    %298 = vmatpush1.msra.mxu0 0.0
    %299 = vmatprep.subr.mxu0 0.0
    %300 = vmatpush1.msra.mxu0 0.0
    %301 = vmatprep.subr.mxu0 0.0
    %302 = vmatpush1.msra.mxu0 0.0
    %303 = vmatprep.subr.mxu0 0.0
    %304 = vmatpush1.msra.mxu0 0.0
    %305 = vmatprep.subr.mxu0 0.0
    %306 = vmatpush1.msra.mxu0 0.0
    %307 = vmatprep.subr.mxu0 0.0
    %308 = vmatpush1.msra.mxu0 0.0
    %309 = vmatprep.subr.mxu0 0.0
    %310 = vmatpush1.msra.mxu0 0.0
    %311 = vmatprep.subr.mxu0 0.0
    %312 = vmatpush1.msra.mxu0 0.0
    %313 = vmatprep.subr.mxu0 0.0
    %314 = vmatpush1.msra.mxu0 0.0
    %315 = vmatprep.subr.mxu0 0.0
    %316 = vmatpush1.msra.mxu0 0.0
    %317 = vmatprep.subr.mxu0 0.0
    %318 = vmatpush1.msra.mxu0 0.0
    %319 = vmatprep.subr.mxu0 0.0
    %320 = vmatpush1.msra.mxu0 0.0
    %321 = vmatprep.subr.mxu0 0.0
    %322 = vmatpush1.msra.mxu0 0.0
    %323 = vmatprep.subr.mxu0 0.0
    %324 = vmatpush1.msra.mxu0 0.0
    %325 = vmatprep.subr.mxu0 0.0
    %326 = vmatpush1.msra.mxu0 0.0
    %327 = vmatprep.subr.mxu0 0.0
    %328 = vmatpush1.msra.mxu0 0.0
    %329 = vmatprep.subr.mxu0 0.0
    %330 = vmatpush1.msra.mxu0 0.0
    %331 = vmatprep.subr.mxu0 0.0
    %332 = vmatpush1.msra.mxu0 0.0
    %333 = vmatprep.subr.mxu0 0.0
    %334 = vmatpush1.msra.mxu0 0.0
    %335 = vmatprep.subr.mxu0 0.0
    %336 = vmatpush1.msra.mxu0 0.0
    %337 = vmatprep.subr.mxu0 0.0
    %338 = vmatpush1.msra.mxu0 0.0
    %339 = vmatprep.subr.mxu0 0.0
    %340 = vmatpush1.msra.mxu0 0.0
    %341 = vmatprep.subr.mxu0 0.0
    %342 = vmatpush1.msra.mxu0 0.0
    %343 = vmatprep.subr.mxu0 0.0
    %344 = vmatpush1.msra.mxu0 0.0
    %345 = vmatprep.subr.mxu0 0.0
    %346 = vmatpush1.msra.mxu0 0.0
    %347 = vmatprep.subr.mxu0 0.0
    %348 = vmatpush1.msra.mxu0 0.0
    %349 = vmatprep.subr.mxu0 0.0
    %350 = vmatpush1.msra.mxu0 0.0
    %351 = vmatprep.subr.mxu0 0.0
    %352 = vmatpush1.msra.mxu0 0.0
    %353 = vmatprep.mubr.f32.mxu0 0.0
    %354 = vmatmul.mubr.f32.gmra.mrb[0].mxu0 %v145
    %v355 = vpop.f32.mrb[0].mxu0
    %v356 = vadd.f32 0.0, %v355
    %v357 = vpop.f32.mrb[0].mxu0
    %v358 = vadd.f32 0.0, %v357
    %359 = vdwg.mxu0
    %v361 = vsel %vm143, %v104, 0
    %363 = vmatprep.subr.mxu0 %v106
    %364 = vmatpush1.msra.mxu0 %v105
    %365 = vmatprep.subr.mxu0 0.0
    %366 = vmatpush1.msra.mxu0 0.0
    %367 = vmatprep.subr.mxu0 0.0
    %368 = vmatpush1.msra.mxu0 0.0
    %369 = vmatprep.subr.mxu0 0.0
    %370 = vmatpush1.msra.mxu0 0.0
    %371 = vmatprep.subr.mxu0 0.0
    %372 = vmatpush1.msra.mxu0 0.0
    %373 = vmatprep.subr.mxu0 0.0
    %374 = vmatpush1.msra.mxu0 0.0
    %375 = vmatprep.subr.mxu0 0.0
    %376 = vmatpush1.msra.mxu0 0.0
    %377 = vmatprep.subr.mxu0 0.0
    %378 = vmatpush1.msra.mxu0 0.0
    %379 = vmatprep.subr.mxu0 0.0
    %380 = vmatpush1.msra.mxu0 0.0
    %381 = vmatprep.subr.mxu0 0.0
    %382 = vmatpush1.msra.mxu0 0.0
    %383 = vmatprep.subr.mxu0 0.0
    %384 = vmatpush1.msra.mxu0 0.0
    %385 = vmatprep.subr.mxu0 0.0
    %386 = vmatpush1.msra.mxu0 0.0
    %387 = vmatprep.subr.mxu0 0.0
    %388 = vmatpush1.msra.mxu0 0.0
    %389 = vmatprep.subr.mxu0 0.0
    %390 = vmatpush1.msra.mxu0 0.0
    %391 = vmatprep.subr.mxu0 0.0
    %392 = vmatpush1.msra.mxu0 0.0
    %393 = vmatprep.subr.mxu0 0.0
    %394 = vmatpush1.msra.mxu0 0.0
    %395 = vmatprep.subr.mxu0 0.0
    %396 = vmatpush1.msra.mxu0 0.0
    %397 = vmatprep.subr.mxu0 0.0
    %398 = vmatpush1.msra.mxu0 0.0
    %399 = vmatprep.subr.mxu0 0.0
    %400 = vmatpush1.msra.mxu0 0.0
    %401 = vmatprep.subr.mxu0 0.0
    %402 = vmatpush1.msra.mxu0 0.0
    %403 = vmatprep.subr.mxu0 0.0
    %404 = vmatpush1.msra.mxu0 0.0
    %405 = vmatprep.subr.mxu0 0.0
    %406 = vmatpush1.msra.mxu0 0.0
    %407 = vmatprep.subr.mxu0 0.0
    %408 = vmatpush1.msra.mxu0 0.0
    %409 = vmatprep.subr.mxu0 0.0
    %410 = vmatpush1.msra.mxu0 0.0
    %411 = vmatprep.subr.mxu0 0.0
    %412 = vmatpush1.msra.mxu0 0.0
    %413 = vmatprep.subr.mxu0 0.0
    %414 = vmatpush1.msra.mxu0 0.0
    %415 = vmatprep.subr.mxu0 0.0
    %416 = vmatpush1.msra.mxu0 0.0
    %417 = vmatprep.subr.mxu0 0.0
    %418 = vmatpush1.msra.mxu0 0.0
    %419 = vmatprep.subr.mxu0 0.0
    %420 = vmatpush1.msra.mxu0 0.0
    %421 = vmatprep.subr.mxu0 0.0
    %422 = vmatpush1.msra.mxu0 0.0
    %423 = vmatprep.subr.mxu0 0.0
    %424 = vmatpush1.msra.mxu0 0.0
    %425 = vmatprep.subr.mxu0 0.0
    %426 = vmatpush1.msra.mxu0 0.0
    %427 = vmatprep.mubr.f32.mxu0 0.0
    %428 = vmatmul.mubr.f32.gmra.mrb[0].mxu0 %v361
    %v429 = vpop.f32.mrb[0].mxu0
    %v430 = vadd.f32 %v214, %v429
    %v431 = vpop.f32.mrb[0].mxu0
    %v432 = vadd.f32 %v216, %v431
    %433 = vdwg.mxu0
    %434 = vmatprep.subr.mxu0 %v108
    %435 = vmatpush1.msra.mxu0 %v107
    %436 = vmatprep.subr.mxu0 0.0
    %437 = vmatpush1.msra.mxu0 0.0
    %438 = vmatprep.subr.mxu0 0.0
    %439 = vmatpush1.msra.mxu0 0.0
    %440 = vmatprep.subr.mxu0 0.0
    %441 = vmatpush1.msra.mxu0 0.0
    %442 = vmatprep.subr.mxu0 0.0
    %443 = vmatpush1.msra.mxu0 0.0
    %444 = vmatprep.subr.mxu0 0.0
    %445 = vmatpush1.msra.mxu0 0.0
    %446 = vmatprep.subr.mxu0 0.0
    %447 = vmatpush1.msra.mxu0 0.0
    %448 = vmatprep.subr.mxu0 0.0
    %449 = vmatpush1.msra.mxu0 0.0
    %450 = vmatprep.subr.mxu0 0.0
    %451 = vmatpush1.msra.mxu0 0.0
    %452 = vmatprep.subr.mxu0 0.0
    %453 = vmatpush1.msra.mxu0 0.0
    %454 = vmatprep.subr.mxu0 0.0
    %455 = vmatpush1.msra.mxu0 0.0
    %456 = vmatprep.subr.mxu0 0.0
    %457 = vmatpush1.msra.mxu0 0.0
    %458 = vmatprep.subr.mxu0 0.0
    %459 = vmatpush1.msra.mxu0 0.0
    %460 = vmatprep.subr.mxu0 0.0
    %461 = vmatpush1.msra.mxu0 0.0
    %462 = vmatprep.subr.mxu0 0.0
    %463 = vmatpush1.msra.mxu0 0.0
    %464 = vmatprep.subr.mxu0 0.0
    %465 = vmatpush1.msra.mxu0 0.0
    %466 = vmatprep.subr.mxu0 0.0
    %467 = vmatpush1.msra.mxu0 0.0
    %468 = vmatprep.subr.mxu0 0.0
    %469 = vmatpush1.msra.mxu0 0.0
    %470 = vmatprep.subr.mxu0 0.0
    %471 = vmatpush1.msra.mxu0 0.0
    %472 = vmatprep.subr.mxu0 0.0
    %473 = vmatpush1.msra.mxu0 0.0
    %474 = vmatprep.subr.mxu0 0.0
    %475 = vmatpush1.msra.mxu0 0.0
    %476 = vmatprep.subr.mxu0 0.0
    %477 = vmatpush1.msra.mxu0 0.0
    %478 = vmatprep.subr.mxu0 0.0
    %479 = vmatpush1.msra.mxu0 0.0
    %480 = vmatprep.subr.mxu0 0.0
    %481 = vmatpush1.msra.mxu0 0.0
    %482 = vmatprep.subr.mxu0 0.0
    %483 = vmatpush1.msra.mxu0 0.0
    %484 = vmatprep.subr.mxu0 0.0
    %485 = vmatpush1.msra.mxu0 0.0
    %486 = vmatprep.subr.mxu0 0.0
    %487 = vmatpush1.msra.mxu0 0.0
    %488 = vmatprep.subr.mxu0 0.0
    %489 = vmatpush1.msra.mxu0 0.0
    %490 = vmatprep.subr.mxu0 0.0
    %491 = vmatpush1.msra.mxu0 0.0
    %492 = vmatprep.subr.mxu0 0.0
    %493 = vmatpush1.msra.mxu0 0.0
    %494 = vmatprep.subr.mxu0 0.0
    %495 = vmatpush1.msra.mxu0 0.0
    %496 = vmatprep.subr.mxu0 0.0
    %497 = vmatpush1.msra.mxu0 0.0
    %498 = vmatprep.mubr.f32.mxu0 0.0
    %499 = vmatmul.mubr.f32.gmra.mrb[0].mxu0 %v361
    %v500 = vpop.f32.mrb[0].mxu0
    %v501 = vadd.f32 %v285, %v500
    %v502 = vpop.f32.mrb[0].mxu0
    %v503 = vadd.f32 %v287, %v502
    %504 = vdwg.mxu0
    %505 = vmatprep.subr.mxu0 %v110
    %506 = vmatpush1.msra.mxu0 %v109
    %507 = vmatprep.subr.mxu0 0.0
    %508 = vmatpush1.msra.mxu0 0.0
    %509 = vmatprep.subr.mxu0 0.0
    %510 = vmatpush1.msra.mxu0 0.0
    %511 = vmatprep.subr.mxu0 0.0
    %512 = vmatpush1.msra.mxu0 0.0
    %513 = vmatprep.subr.mxu0 0.0
    %514 = vmatpush1.msra.mxu0 0.0
    %515 = vmatprep.subr.mxu0 0.0
    %516 = vmatpush1.msra.mxu0 0.0
    %517 = vmatprep.subr.mxu0 0.0
    %518 = vmatpush1.msra.mxu0 0.0
    %519 = vmatprep.subr.mxu0 0.0
    %520 = vmatpush1.msra.mxu0 0.0
    %521 = vmatprep.subr.mxu0 0.0
    %522 = vmatpush1.msra.mxu0 0.0
    %523 = vmatprep.subr.mxu0 0.0
    %524 = vmatpush1.msra.mxu0 0.0
    %525 = vmatprep.subr.mxu0 0.0
    %526 = vmatpush1.msra.mxu0 0.0
    %527 = vmatprep.subr.mxu0 0.0
    %528 = vmatpush1.msra.mxu0 0.0
    %529 = vmatprep.subr.mxu0 0.0
    %530 = vmatpush1.msra.mxu0 0.0
    %531 = vmatprep.subr.mxu0 0.0
    %532 = vmatpush1.msra.mxu0 0.0
    %533 = vmatprep.subr.mxu0 0.0
    %534 = vmatpush1.msra.mxu0 0.0
    %535 = vmatprep.subr.mxu0 0.0
    %536 = vmatpush1.msra.mxu0 0.0
    %537 = vmatprep.subr.mxu0 0.0
    %538 = vmatpush1.msra.mxu0 0.0
    %539 = vmatprep.subr.mxu0 0.0
    %540 = vmatpush1.msra.mxu0 0.0
    %541 = vmatprep.subr.mxu0 0.0
    %542 = vmatpush1.msra.mxu0 0.0
    %543 = vmatprep.subr.mxu0 0.0
    %544 = vmatpush1.msra.mxu0 0.0
    %545 = vmatprep.subr.mxu0 0.0
    %546 = vmatpush1.msra.mxu0 0.0
    %547 = vmatprep.subr.mxu0 0.0
    %548 = vmatpush1.msra.mxu0 0.0
    %549 = vmatprep.subr.mxu0 0.0
    %550 = vmatpush1.msra.mxu0 0.0
    %551 = vmatprep.subr.mxu0 0.0
    %552 = vmatpush1.msra.mxu0 0.0
    %553 = vmatprep.subr.mxu0 0.0
    %554 = vmatpush1.msra.mxu0 0.0
    %555 = vmatprep.subr.mxu0 0.0
    %556 = vmatpush1.msra.mxu0 0.0
    %557 = vmatprep.subr.mxu0 0.0
    %558 = vmatpush1.msra.mxu0 0.0
    %559 = vmatprep.subr.mxu0 0.0
    %560 = vmatpush1.msra.mxu0 0.0
    %561 = vmatprep.subr.mxu0 0.0
    %562 = vmatpush1.msra.mxu0 0.0
    %563 = vmatprep.subr.mxu0 0.0
    %564 = vmatpush1.msra.mxu0 0.0
    %565 = vmatprep.subr.mxu0 0.0
    %566 = vmatpush1.msra.mxu0 0.0
    %567 = vmatprep.subr.mxu0 0.0
    %568 = vmatpush1.msra.mxu0 0.0
    %569 = vmatprep.mubr.f32.mxu0 0.0
    %570 = vmatmul.mubr.f32.gmra.mrb[0].mxu0 %v361
    %v571 = vpop.f32.mrb[0].mxu0
    %v572 = vadd.f32 %v356, %v571
    %v573 = vpop.f32.mrb[0].mxu0
    %v574 = vadd.f32 %v358, %v573
    %575 = vdwg.mxu0
    %s576 = scalar_lea.vmem %s0, 16
    %v577 = vld [vmem:[%s576] sm:$0xff]
    %578 = vrot.lane.b32.xlu0 %v105, 126
    %v579 = vpop.permute.xlu0 %578
    %580 = vrot.lane.b32.xlu0 %v106, 126
    %v581 = vpop.permute.xlu0 %580
    %582 = vrot.lane.b32.xlu0 %v107, 126
    %v583 = vpop.permute.xlu0 %582
    %584 = vrot.lane.b32.xlu0 %v108, 126
    %v585 = vpop.permute.xlu0 %584
    %586 = vrot.lane.b32.xlu0 %v109, 126
    %v587 = vpop.permute.xlu0 %586
    %588 = vrot.lane.b32.xlu0 %v110, 126
    %v589 = vpop.permute.xlu0 %588
    %vm590 = vcmask 1031168
    %v591 = vsel %vm590, %v579, %v581
    %v592 = vsel %vm590, %v581, %v583
    %v593 = vsel %vm590, %v583, %v585
    %v594 = vsel %vm590, %v585, %v587
    %v595 = vsel %vm590, %v587, %v589
    %v603 = vsel %vm143, %v577, 0
    %605 = vmatprep.subr.mxu0 %v592
    %606 = vmatpush1.msra.mxu0 %v591
    %607 = vmatprep.subr.mxu0 0.0
    %608 = vmatpush1.msra.mxu0 0.0
    %609 = vmatprep.subr.mxu0 0.0
    %610 = vmatpush1.msra.mxu0 0.0
    %611 = vmatprep.subr.mxu0 0.0
    %612 = vmatpush1.msra.mxu0 0.0
    %613 = vmatprep.subr.mxu0 0.0
    %614 = vmatpush1.msra.mxu0 0.0
    %615 = vmatprep.subr.mxu0 0.0
    %616 = vmatpush1.msra.mxu0 0.0
    %617 = vmatprep.subr.mxu0 0.0
    %618 = vmatpush1.msra.mxu0 0.0
    %619 = vmatprep.subr.mxu0 0.0
    %620 = vmatpush1.msra.mxu0 0.0
    %621 = vmatprep.subr.mxu0 0.0
    %622 = vmatpush1.msra.mxu0 0.0
    %623 = vmatprep.subr.mxu0 0.0
    %624 = vmatpush1.msra.mxu0 0.0
    %625 = vmatprep.subr.mxu0 0.0
    %626 = vmatpush1.msra.mxu0 0.0
    %627 = vmatprep.subr.mxu0 0.0
    %628 = vmatpush1.msra.mxu0 0.0
    %629 = vmatprep.subr.mxu0 0.0
    %630 = vmatpush1.msra.mxu0 0.0
    %631 = vmatprep.subr.mxu0 0.0
    %632 = vmatpush1.msra.mxu0 0.0
    %633 = vmatprep.subr.mxu0 0.0
    %634 = vmatpush1.msra.mxu0 0.0
    %635 = vmatprep.subr.mxu0 0.0
    %636 = vmatpush1.msra.mxu0 0.0
    %637 = vmatprep.subr.mxu0 0.0
    %638 = vmatpush1.msra.mxu0 0.0
    %639 = vmatprep.subr.mxu0 0.0
    %640 = vmatpush1.msra.mxu0 0.0
    %641 = vmatprep.subr.mxu0 0.0
    %642 = vmatpush1.msra.mxu0 0.0
    %643 = vmatprep.subr.mxu0 0.0
    %644 = vmatpush1.msra.mxu0 0.0
    %645 = vmatprep.subr.mxu0 0.0
    %646 = vmatpush1.msra.mxu0 0.0
    %647 = vmatprep.subr.mxu0 0.0
    %648 = vmatpush1.msra.mxu0 0.0
    %649 = vmatprep.subr.mxu0 0.0
    %650 = vmatpush1.msra.mxu0 0.0
    %651 = vmatprep.subr.mxu0 0.0
    %652 = vmatpush1.msra.mxu0 0.0
    %653 = vmatprep.subr.mxu0 0.0
    %654 = vmatpush1.msra.mxu0 0.0
    %655 = vmatprep.subr.mxu0 0.0
    %656 = vmatpush1.msra.mxu0 0.0
    %657 = vmatprep.subr.mxu0 0.0
    %658 = vmatpush1.msra.mxu0 0.0
    %659 = vmatprep.subr.mxu0 0.0
    %660 = vmatpush1.msra.mxu0 0.0
    %661 = vmatprep.subr.mxu0 0.0
    %662 = vmatpush1.msra.mxu0 0.0
    %663 = vmatprep.subr.mxu0 0.0
    %664 = vmatpush1.msra.mxu0 0.0
    %665 = vmatprep.subr.mxu0 0.0
    %666 = vmatpush1.msra.mxu0 0.0
    %667 = vmatprep.subr.mxu0 0.0
    %668 = vmatpush1.msra.mxu0 0.0
    %669 = vmatprep.mubr.f32.mxu0 0.0
    %670 = vmatmul.mubr.f32.gmra.mrb[0].mxu0 %v603
    %v671 = vpop.f32.mrb[0].mxu0
    %v672 = vadd.f32 0.0, %v671
    %v673 = vpop.f32.mrb[0].mxu0
    %v674 = vadd.f32 0.0, %v673
    %675 = vdwg.mxu0
    %676 = vmatprep.subr.mxu0 %v594
    %677 = vmatpush1.msra.mxu0 %v593
    %678 = vmatprep.subr.mxu0 0.0
    %679 = vmatpush1.msra.mxu0 0.0
    %680 = vmatprep.subr.mxu0 0.0
    %681 = vmatpush1.msra.mxu0 0.0
    %682 = vmatprep.subr.mxu0 0.0
    %683 = vmatpush1.msra.mxu0 0.0
    %684 = vmatprep.subr.mxu0 0.0
    %685 = vmatpush1.msra.mxu0 0.0
    %686 = vmatprep.subr.mxu0 0.0
    %687 = vmatpush1.msra.mxu0 0.0
    %688 = vmatprep.subr.mxu0 0.0
    %689 = vmatpush1.msra.mxu0 0.0
    %690 = vmatprep.subr.mxu0 0.0
    %691 = vmatpush1.msra.mxu0 0.0
    %692 = vmatprep.subr.mxu0 0.0
    %693 = vmatpush1.msra.mxu0 0.0
    %694 = vmatprep.subr.mxu0 0.0
    %695 = vmatpush1.msra.mxu0 0.0
    %696 = vmatprep.subr.mxu0 0.0
    %697 = vmatpush1.msra.mxu0 0.0
    %698 = vmatprep.subr.mxu0 0.0
    %699 = vmatpush1.msra.mxu0 0.0
    %700 = vmatprep.subr.mxu0 0.0
    %701 = vmatpush1.msra.mxu0 0.0
    %702 = vmatprep.subr.mxu0 0.0
    %703 = vmatpush1.msra.mxu0 0.0
    %704 = vmatprep.subr.mxu0 0.0
    %705 = vmatpush1.msra.mxu0 0.0
    %706 = vmatprep.subr.mxu0 0.0
    %707 = vmatpush1.msra.mxu0 0.0
    %708 = vmatprep.subr.mxu0 0.0
    %709 = vmatpush1.msra.mxu0 0.0
    %710 = vmatprep.subr.mxu0 0.0
    %711 = vmatpush1.msra.mxu0 0.0
    %712 = vmatprep.subr.mxu0 0.0
    %713 = vmatpush1.msra.mxu0 0.0
    %714 = vmatprep.subr.mxu0 0.0
    %715 = vmatpush1.msra.mxu0 0.0
    %716 = vmatprep.subr.mxu0 0.0
    %717 = vmatpush1.msra.mxu0 0.0
    %718 = vmatprep.subr.mxu0 0.0
    %719 = vmatpush1.msra.mxu0 0.0
    %720 = vmatprep.subr.mxu0 0.0
    %721 = vmatpush1.msra.mxu0 0.0
    %722 = vmatprep.subr.mxu0 0.0
    %723 = vmatpush1.msra.mxu0 0.0
    %724 = vmatprep.subr.mxu0 0.0
    %725 = vmatpush1.msra.mxu0 0.0
    %726 = vmatprep.subr.mxu0 0.0
    %727 = vmatpush1.msra.mxu0 0.0
    %728 = vmatprep.subr.mxu0 0.0
    %729 = vmatpush1.msra.mxu0 0.0
    %730 = vmatprep.subr.mxu0 0.0
    %731 = vmatpush1.msra.mxu0 0.0
    %732 = vmatprep.subr.mxu0 0.0
    %733 = vmatpush1.msra.mxu0 0.0
    %734 = vmatprep.subr.mxu0 0.0
    %735 = vmatpush1.msra.mxu0 0.0
    %736 = vmatprep.subr.mxu0 0.0
    %737 = vmatpush1.msra.mxu0 0.0
    %738 = vmatprep.subr.mxu0 0.0
    %739 = vmatpush1.msra.mxu0 0.0
    %740 = vmatprep.mubr.f32.mxu0 0.0
    %741 = vmatmul.mubr.f32.gmra.mrb[0].mxu0 %v603
    %v742 = vpop.f32.mrb[0].mxu0
    %v743 = vadd.f32 0.0, %v742
    %v744 = vpop.f32.mrb[0].mxu0
    %v745 = vadd.f32 0.0, %v744
    %746 = vdwg.mxu0
    %747 = vmatprep.subr.mxu0 %v589
    %748 = vmatpush1.msra.mxu0 %v595
    %749 = vmatprep.subr.mxu0 0.0
    %750 = vmatpush1.msra.mxu0 0.0
    %751 = vmatprep.subr.mxu0 0.0
    %752 = vmatpush1.msra.mxu0 0.0
    %753 = vmatprep.subr.mxu0 0.0
    %754 = vmatpush1.msra.mxu0 0.0
    %755 = vmatprep.subr.mxu0 0.0
    %756 = vmatpush1.msra.mxu0 0.0
    %757 = vmatprep.subr.mxu0 0.0
    %758 = vmatpush1.msra.mxu0 0.0
    %759 = vmatprep.subr.mxu0 0.0
    %760 = vmatpush1.msra.mxu0 0.0
    %761 = vmatprep.subr.mxu0 0.0
    %762 = vmatpush1.msra.mxu0 0.0
    %763 = vmatprep.subr.mxu0 0.0
    %764 = vmatpush1.msra.mxu0 0.0
    %765 = vmatprep.subr.mxu0 0.0
    %766 = vmatpush1.msra.mxu0 0.0
    %767 = vmatprep.subr.mxu0 0.0
    %768 = vmatpush1.msra.mxu0 0.0
    %769 = vmatprep.subr.mxu0 0.0
    %770 = vmatpush1.msra.mxu0 0.0
    %771 = vmatprep.subr.mxu0 0.0
    %772 = vmatpush1.msra.mxu0 0.0
    %773 = vmatprep.subr.mxu0 0.0
    %774 = vmatpush1.msra.mxu0 0.0
    %775 = vmatprep.subr.mxu0 0.0
    %776 = vmatpush1.msra.mxu0 0.0
    %777 = vmatprep.subr.mxu0 0.0
    %778 = vmatpush1.msra.mxu0 0.0
    %779 = vmatprep.subr.mxu0 0.0
    %780 = vmatpush1.msra.mxu0 0.0
    %781 = vmatprep.subr.mxu0 0.0
    %782 = vmatpush1.msra.mxu0 0.0
    %783 = vmatprep.subr.mxu0 0.0
    %784 = vmatpush1.msra.mxu0 0.0
    %785 = vmatprep.subr.mxu0 0.0
    %786 = vmatpush1.msra.mxu0 0.0
    %787 = vmatprep.subr.mxu0 0.0
    %788 = vmatpush1.msra.mxu0 0.0
    %789 = vmatprep.subr.mxu0 0.0
    %790 = vmatpush1.msra.mxu0 0.0
    %791 = vmatprep.subr.mxu0 0.0
    %792 = vmatpush1.msra.mxu0 0.0
    %793 = vmatprep.subr.mxu0 0.0
    %794 = vmatpush1.msra.mxu0 0.0
    %795 = vmatprep.subr.mxu0 0.0
    %796 = vmatpush1.msra.mxu0 0.0
    %797 = vmatprep.subr.mxu0 0.0
    %798 = vmatpush1.msra.mxu0 0.0
    %799 = vmatprep.subr.mxu0 0.0
    %800 = vmatpush1.msra.mxu0 0.0
    %801 = vmatprep.subr.mxu0 0.0
    %802 = vmatpush1.msra.mxu0 0.0
    %803 = vmatprep.subr.mxu0 0.0
    %804 = vmatpush1.msra.mxu0 0.0
    %805 = vmatprep.subr.mxu0 0.0
    %806 = vmatpush1.msra.mxu0 0.0
    %807 = vmatprep.subr.mxu0 0.0
    %808 = vmatpush1.msra.mxu0 0.0
    %809 = vmatprep.subr.mxu0 0.0
    %810 = vmatpush1.msra.mxu0 0.0
    %811 = vmatprep.mubr.f32.mxu0 0.0
    %812 = vmatmul.mubr.f32.gmra.mrb[0].mxu0 %v603
    %v813 = vpop.f32.mrb[0].mxu0
    %v814 = vadd.f32 0.0, %v813
    %v815 = vpop.f32.mrb[0].mxu0
    %v816 = vadd.f32 0.0, %v815
    %817 = vdwg.mxu0
    %v818 = vadd.f32 %v430, %v672
    %v819 = vadd.f32 %v432, %v674
    %v820 = vadd.f32 %v501, %v743
    %v821 = vadd.f32 %v503, %v745
    %v822 = vadd.f32 %v572, %v814
    %v823 = vadd.f32 %v574, %v816
    %s824 = scalar_lea.vmem %s0, 24
    %v825 = vld [vmem:[%s824] sm:$0xff]
    %826 = vrot.lane.b32.xlu0 %v105, 110
    %v827 = vpop.permute.xlu0 %826
    %828 = vrot.lane.b32.xlu0 %v106, 110
    %v829 = vpop.permute.xlu0 %828
    %830 = vrot.lane.b32.xlu0 %v107, 110
    %v831 = vpop.permute.xlu0 %830
    %832 = vrot.lane.b32.xlu0 %v108, 110
    %v833 = vpop.permute.xlu0 %832
    %834 = vrot.lane.b32.xlu0 %v109, 110
    %v835 = vpop.permute.xlu0 %834
    %836 = vrot.lane.b32.xlu0 %v110, 110
    %v837 = vpop.permute.xlu0 %836
    %vm838 = vcmask 900096
    %v839 = vsel %vm838, %v827, %v829
    %v840 = vsel %vm838, %v829, %v831
    %v841 = vsel %vm838, %v831, %v833
    %v842 = vsel %vm838, %v833, %v835
    %v843 = vsel %vm838, %v835, %v837
    %v851 = vsel %vm143, %v825, 0
    %853 = vmatprep.subr.mxu0 %v840
    %854 = vmatpush1.msra.mxu0 %v839
    %855 = vmatprep.subr.mxu0 0.0
    %856 = vmatpush1.msra.mxu0 0.0
    %857 = vmatprep.subr.mxu0 0.0
    %858 = vmatpush1.msra.mxu0 0.0
    %859 = vmatprep.subr.mxu0 0.0
    %860 = vmatpush1.msra.mxu0 0.0
    %861 = vmatprep.subr.mxu0 0.0
    %862 = vmatpush1.msra.mxu0 0.0
    %863 = vmatprep.subr.mxu0 0.0
    %864 = vmatpush1.msra.mxu0 0.0
    %865 = vmatprep.subr.mxu0 0.0
    %866 = vmatpush1.msra.mxu0 0.0
    %867 = vmatprep.subr.mxu0 0.0
    %868 = vmatpush1.msra.mxu0 0.0
    %869 = vmatprep.subr.mxu0 0.0
    %870 = vmatpush1.msra.mxu0 0.0
    %871 = vmatprep.subr.mxu0 0.0
    %872 = vmatpush1.msra.mxu0 0.0
    %873 = vmatprep.subr.mxu0 0.0
    %874 = vmatpush1.msra.mxu0 0.0
    %875 = vmatprep.subr.mxu0 0.0
    %876 = vmatpush1.msra.mxu0 0.0
    %877 = vmatprep.subr.mxu0 0.0
    %878 = vmatpush1.msra.mxu0 0.0
    %879 = vmatprep.subr.mxu0 0.0
    %880 = vmatpush1.msra.mxu0 0.0
    %881 = vmatprep.subr.mxu0 0.0
    %882 = vmatpush1.msra.mxu0 0.0
    %883 = vmatprep.subr.mxu0 0.0
    %884 = vmatpush1.msra.mxu0 0.0
    %885 = vmatprep.subr.mxu0 0.0
    %886 = vmatpush1.msra.mxu0 0.0
    %887 = vmatprep.subr.mxu0 0.0
    %888 = vmatpush1.msra.mxu0 0.0
    %889 = vmatprep.subr.mxu0 0.0
    %890 = vmatpush1.msra.mxu0 0.0
    %891 = vmatprep.subr.mxu0 0.0
    %892 = vmatpush1.msra.mxu0 0.0
    %893 = vmatprep.subr.mxu0 0.0
    %894 = vmatpush1.msra.mxu0 0.0
    %895 = vmatprep.subr.mxu0 0.0
    %896 = vmatpush1.msra.mxu0 0.0
    %897 = vmatprep.subr.mxu0 0.0
    %898 = vmatpush1.msra.mxu0 0.0
    %899 = vmatprep.subr.mxu0 0.0
    %900 = vmatpush1.msra.mxu0 0.0
    %901 = vmatprep.subr.mxu0 0.0
    %902 = vmatpush1.msra.mxu0 0.0
    %903 = vmatprep.subr.mxu0 0.0
    %904 = vmatpush1.msra.mxu0 0.0
    %905 = vmatprep.subr.mxu0 0.0
    %906 = vmatpush1.msra.mxu0 0.0
    %907 = vmatprep.subr.mxu0 0.0
    %908 = vmatpush1.msra.mxu0 0.0
    %909 = vmatprep.subr.mxu0 0.0
    %910 = vmatpush1.msra.mxu0 0.0
    %911 = vmatprep.subr.mxu0 0.0
    %912 = vmatpush1.msra.mxu0 0.0
    %913 = vmatprep.subr.mxu0 0.0
    %914 = vmatpush1.msra.mxu0 0.0
    %915 = vmatprep.subr.mxu0 0.0
    %916 = vmatpush1.msra.mxu0 0.0
    %917 = vmatprep.mubr.f32.mxu0 0.0
    %918 = vmatmul.mubr.f32.gmra.mrb[0].mxu0 %v851
    %v919 = vpop.f32.mrb[0].mxu0
    %v920 = vadd.f32 0.0, %v919
    %v921 = vpop.f32.mrb[0].mxu0
    %v922 = vadd.f32 0.0, %v921
    %923 = vdwg.mxu0
    %924 = vmatprep.subr.mxu0 %v842
    %925 = vmatpush1.msra.mxu0 %v841
    %926 = vmatprep.subr.mxu0 0.0
    %927 = vmatpush1.msra.mxu0 0.0
    %928 = vmatprep.subr.mxu0 0.0
    %929 = vmatpush1.msra.mxu0 0.0
    %930 = vmatprep.subr.mxu0 0.0
    %931 = vmatpush1.msra.mxu0 0.0
    %932 = vmatprep.subr.mxu0 0.0
    %933 = vmatpush1.msra.mxu0 0.0
    %934 = vmatprep.subr.mxu0 0.0
    %935 = vmatpush1.msra.mxu0 0.0
    %936 = vmatprep.subr.mxu0 0.0
    %937 = vmatpush1.msra.mxu0 0.0
    %938 = vmatprep.subr.mxu0 0.0
    %939 = vmatpush1.msra.mxu0 0.0
    %940 = vmatprep.subr.mxu0 0.0
    %941 = vmatpush1.msra.mxu0 0.0
    %942 = vmatprep.subr.mxu0 0.0
    %943 = vmatpush1.msra.mxu0 0.0
    %944 = vmatprep.subr.mxu0 0.0
    %945 = vmatpush1.msra.mxu0 0.0
    %946 = vmatprep.subr.mxu0 0.0
    %947 = vmatpush1.msra.mxu0 0.0
    %948 = vmatprep.subr.mxu0 0.0
    %949 = vmatpush1.msra.mxu0 0.0
    %950 = vmatprep.subr.mxu0 0.0
    %951 = vmatpush1.msra.mxu0 0.0
    %952 = vmatprep.subr.mxu0 0.0
    %953 = vmatpush1.msra.mxu0 0.0
    %954 = vmatprep.subr.mxu0 0.0
    %955 = vmatpush1.msra.mxu0 0.0
    %956 = vmatprep.subr.mxu0 0.0
    %957 = vmatpush1.msra.mxu0 0.0
    %958 = vmatprep.subr.mxu0 0.0
    %959 = vmatpush1.msra.mxu0 0.0
    %960 = vmatprep.subr.mxu0 0.0
    %961 = vmatpush1.msra.mxu0 0.0
    %962 = vmatprep.subr.mxu0 0.0
    %963 = vmatpush1.msra.mxu0 0.0
    %964 = vmatprep.subr.mxu0 0.0
    %965 = vmatpush1.msra.mxu0 0.0
    %966 = vmatprep.subr.mxu0 0.0
    %967 = vmatpush1.msra.mxu0 0.0
    %968 = vmatprep.subr.mxu0 0.0
    %969 = vmatpush1.msra.mxu0 0.0
    %970 = vmatprep.subr.mxu0 0.0
    %971 = vmatpush1.msra.mxu0 0.0
    %972 = vmatprep.subr.mxu0 0.0
    %973 = vmatpush1.msra.mxu0 0.0
    %974 = vmatprep.subr.mxu0 0.0
    %975 = vmatpush1.msra.mxu0 0.0
    %976 = vmatprep.subr.mxu0 0.0
    %977 = vmatpush1.msra.mxu0 0.0
    %978 = vmatprep.subr.mxu0 0.0
    %979 = vmatpush1.msra.mxu0 0.0
    %980 = vmatprep.subr.mxu0 0.0
    %981 = vmatpush1.msra.mxu0 0.0
    %982 = vmatprep.subr.mxu0 0.0
    %983 = vmatpush1.msra.mxu0 0.0
    %984 = vmatprep.subr.mxu0 0.0
    %985 = vmatpush1.msra.mxu0 0.0
    %986 = vmatprep.subr.mxu0 0.0
    %987 = vmatpush1.msra.mxu0 0.0
    %988 = vmatprep.mubr.f32.mxu0 0.0
    %989 = vmatmul.mubr.f32.gmra.mrb[0].mxu0 %v851
    %v990 = vpop.f32.mrb[0].mxu0
    %v991 = vadd.f32 0.0, %v990
    %v992 = vpop.f32.mrb[0].mxu0
    %v993 = vadd.f32 0.0, %v992
    %994 = vdwg.mxu0
    %995 = vmatprep.subr.mxu0 %v837
    %996 = vmatpush1.msra.mxu0 %v843
    %997 = vmatprep.subr.mxu0 0.0
    %998 = vmatpush1.msra.mxu0 0.0
    %999 = vmatprep.subr.mxu0 0.0
    %1000 = vmatpush1.msra.mxu0 0.0
    %1001 = vmatprep.subr.mxu0 0.0
    %1002 = vmatpush1.msra.mxu0 0.0
    %1003 = vmatprep.subr.mxu0 0.0
    %1004 = vmatpush1.msra.mxu0 0.0
    %1005 = vmatprep.subr.mxu0 0.0
    %1006 = vmatpush1.msra.mxu0 0.0
    %1007 = vmatprep.subr.mxu0 0.0
    %1008 = vmatpush1.msra.mxu0 0.0
    %1009 = vmatprep.subr.mxu0 0.0
    %1010 = vmatpush1.msra.mxu0 0.0
    %1011 = vmatprep.subr.mxu0 0.0
    %1012 = vmatpush1.msra.mxu0 0.0
    %1013 = vmatprep.subr.mxu0 0.0
    %1014 = vmatpush1.msra.mxu0 0.0
    %1015 = vmatprep.subr.mxu0 0.0
    %1016 = vmatpush1.msra.mxu0 0.0
    %1017 = vmatprep.subr.mxu0 0.0
    %1018 = vmatpush1.msra.mxu0 0.0
    %1019 = vmatprep.subr.mxu0 0.0
    %1020 = vmatpush1.msra.mxu0 0.0
    %1021 = vmatprep.subr.mxu0 0.0
    %1022 = vmatpush1.msra.mxu0 0.0
    %1023 = vmatprep.subr.mxu0 0.0
    %1024 = vmatpush1.msra.mxu0 0.0
    %1025 = vmatprep.subr.mxu0 0.0
    %1026 = vmatpush1.msra.mxu0 0.0
    %1027 = vmatprep.subr.mxu0 0.0
    %1028 = vmatpush1.msra.mxu0 0.0
    %1029 = vmatprep.subr.mxu0 0.0
    %1030 = vmatpush1.msra.mxu0 0.0
    %1031 = vmatprep.subr.mxu0 0.0
    %1032 = vmatpush1.msra.mxu0 0.0
    %1033 = vmatprep.subr.mxu0 0.0
    %1034 = vmatpush1.msra.mxu0 0.0
    %1035 = vmatprep.subr.mxu0 0.0
    %1036 = vmatpush1.msra.mxu0 0.0
    %1037 = vmatprep.subr.mxu0 0.0
    %1038 = vmatpush1.msra.mxu0 0.0
    %1039 = vmatprep.subr.mxu0 0.0
    %1040 = vmatpush1.msra.mxu0 0.0
    %1041 = vmatprep.subr.mxu0 0.0
    %1042 = vmatpush1.msra.mxu0 0.0
    %1043 = vmatprep.subr.mxu0 0.0
    %1044 = vmatpush1.msra.mxu0 0.0
    %1045 = vmatprep.subr.mxu0 0.0
    %1046 = vmatpush1.msra.mxu0 0.0
    %1047 = vmatprep.subr.mxu0 0.0
    %1048 = vmatpush1.msra.mxu0 0.0
    %1049 = vmatprep.subr.mxu0 0.0
    %1050 = vmatpush1.msra.mxu0 0.0
    %1051 = vmatprep.subr.mxu0 0.0
    %1052 = vmatpush1.msra.mxu0 0.0
    %1053 = vmatprep.subr.mxu0 0.0
    %1054 = vmatpush1.msra.mxu0 0.0
    %1055 = vmatprep.subr.mxu0 0.0
    %1056 = vmatpush1.msra.mxu0 0.0
    %1057 = vmatprep.subr.mxu0 0.0
    %1058 = vmatpush1.msra.mxu0 0.0
    %1059 = vmatprep.mubr.f32.mxu0 0.0
    %1060 = vmatmul.mubr.f32.gmra.mrb[0].mxu0 %v851
    %v1061 = vpop.f32.mrb[0].mxu0
    %v1062 = vadd.f32 0.0, %v1061
    %v1063 = vpop.f32.mrb[0].mxu0
    %v1064 = vadd.f32 0.0, %v1063
    %1065 = vdwg.mxu0
    %v1066 = vadd.f32 %v818, %v920
    %v1067 = vadd.f32 %v819, %v922
    %v1068 = vadd.f32 %v820, %v991
    %v1069 = vadd.f32 %v821, %v993
    %v1070 = vadd.f32 %v822, %v1062
    %v1071 = vadd.f32 %v823, %v1064
    %s1072 = scalar_lea.vmem %s0, 32
    %v1073 = vld [vmem:[%s1072] sm:$0xff]
    %1074 = vrot.lane.b32.xlu0 %v105, 109
    %v1075 = vpop.permute.xlu0 %1074
    %1076 = vrot.lane.b32.xlu0 %v106, 109
    %v1077 = vpop.permute.xlu0 %1076
    %1078 = vrot.lane.b32.xlu0 %v107, 109
    %v1079 = vpop.permute.xlu0 %1078
    %1080 = vrot.lane.b32.xlu0 %v108, 109
    %v1081 = vpop.permute.xlu0 %1080
    %1082 = vrot.lane.b32.xlu0 %v109, 109
    %v1083 = vpop.permute.xlu0 %1082
    %1084 = vrot.lane.b32.xlu0 %v110, 109
    %v1085 = vpop.permute.xlu0 %1084
    %vm1086 = vcmask 891904
    %v1087 = vsel %vm1086, %v1075, %v1077
    %v1088 = vsel %vm1086, %v1077, %v1079
    %v1089 = vsel %vm1086, %v1079, %v1081
    %v1090 = vsel %vm1086, %v1081, %v1083
    %v1091 = vsel %vm1086, %v1083, %v1085
    %v1099 = vsel %vm143, %v1073, 0
    %1101 = vmatprep.subr.mxu0 %v1088
    %1102 = vmatpush1.msra.mxu0 %v1087
    %1103 = vmatprep.subr.mxu0 0.0
    %1104 = vmatpush1.msra.mxu0 0.0
    %1105 = vmatprep.subr.mxu0 0.0
    %1106 = vmatpush1.msra.mxu0 0.0
    %1107 = vmatprep.subr.mxu0 0.0
    %1108 = vmatpush1.msra.mxu0 0.0
    %1109 = vmatprep.subr.mxu0 0.0
    %1110 = vmatpush1.msra.mxu0 0.0
    %1111 = vmatprep.subr.mxu0 0.0
    %1112 = vmatpush1.msra.mxu0 0.0
    %1113 = vmatprep.subr.mxu0 0.0
    %1114 = vmatpush1.msra.mxu0 0.0
    %1115 = vmatprep.subr.mxu0 0.0
    %1116 = vmatpush1.msra.mxu0 0.0
    %1117 = vmatprep.subr.mxu0 0.0
    %1118 = vmatpush1.msra.mxu0 0.0
    %1119 = vmatprep.subr.mxu0 0.0
    %1120 = vmatpush1.msra.mxu0 0.0
    %1121 = vmatprep.subr.mxu0 0.0
    %1122 = vmatpush1.msra.mxu0 0.0
    %1123 = vmatprep.subr.mxu0 0.0
    %1124 = vmatpush1.msra.mxu0 0.0
    %1125 = vmatprep.subr.mxu0 0.0
    %1126 = vmatpush1.msra.mxu0 0.0
    %1127 = vmatprep.subr.mxu0 0.0
    %1128 = vmatpush1.msra.mxu0 0.0
    %1129 = vmatprep.subr.mxu0 0.0
    %1130 = vmatpush1.msra.mxu0 0.0
    %1131 = vmatprep.subr.mxu0 0.0
    %1132 = vmatpush1.msra.mxu0 0.0
    %1133 = vmatprep.subr.mxu0 0.0
    %1134 = vmatpush1.msra.mxu0 0.0
    %1135 = vmatprep.subr.mxu0 0.0
    %1136 = vmatpush1.msra.mxu0 0.0
    %1137 = vmatprep.subr.mxu0 0.0
    %1138 = vmatpush1.msra.mxu0 0.0
    %1139 = vmatprep.subr.mxu0 0.0
    %1140 = vmatpush1.msra.mxu0 0.0
    %1141 = vmatprep.subr.mxu0 0.0
    %1142 = vmatpush1.msra.mxu0 0.0
    %1143 = vmatprep.subr.mxu0 0.0
    %1144 = vmatpush1.msra.mxu0 0.0
    %1145 = vmatprep.subr.mxu0 0.0
    %1146 = vmatpush1.msra.mxu0 0.0
    %1147 = vmatprep.subr.mxu0 0.0
    %1148 = vmatpush1.msra.mxu0 0.0
    %1149 = vmatprep.subr.mxu0 0.0
    %1150 = vmatpush1.msra.mxu0 0.0
    %1151 = vmatprep.subr.mxu0 0.0
    %1152 = vmatpush1.msra.mxu0 0.0
    %1153 = vmatprep.subr.mxu0 0.0
    %1154 = vmatpush1.msra.mxu0 0.0
    %1155 = vmatprep.subr.mxu0 0.0
    %1156 = vmatpush1.msra.mxu0 0.0
    %1157 = vmatprep.subr.mxu0 0.0
    %1158 = vmatpush1.msra.mxu0 0.0
    %1159 = vmatprep.subr.mxu0 0.0
    %1160 = vmatpush1.msra.mxu0 0.0
    %1161 = vmatprep.subr.mxu0 0.0
    %1162 = vmatpush1.msra.mxu0 0.0
    %1163 = vmatprep.subr.mxu0 0.0
    %1164 = vmatpush1.msra.mxu0 0.0
    %1165 = vmatprep.mubr.f32.mxu0 0.0
    %1166 = vmatmul.mubr.f32.gmra.mrb[0].mxu0 %v1099
    %v1167 = vpop.f32.mrb[0].mxu0
    %v1168 = vadd.f32 0.0, %v1167
    %v1169 = vpop.f32.mrb[0].mxu0
    %v1170 = vadd.f32 0.0, %v1169
    %1171 = vdwg.mxu0
    %1172 = vmatprep.subr.mxu0 %v1090
    %1173 = vmatpush1.msra.mxu0 %v1089
    %1174 = vmatprep.subr.mxu0 0.0
    %1175 = vmatpush1.msra.mxu0 0.0
    %1176 = vmatprep.subr.mxu0 0.0
    %1177 = vmatpush1.msra.mxu0 0.0
    %1178 = vmatprep.subr.mxu0 0.0
    %1179 = vmatpush1.msra.mxu0 0.0
    %1180 = vmatprep.subr.mxu0 0.0
    %1181 = vmatpush1.msra.mxu0 0.0
    %1182 = vmatprep.subr.mxu0 0.0
    %1183 = vmatpush1.msra.mxu0 0.0
    %1184 = vmatprep.subr.mxu0 0.0
    %1185 = vmatpush1.msra.mxu0 0.0
    %1186 = vmatprep.subr.mxu0 0.0
    %1187 = vmatpush1.msra.mxu0 0.0
    %1188 = vmatprep.subr.mxu0 0.0
    %1189 = vmatpush1.msra.mxu0 0.0
    %1190 = vmatprep.subr.mxu0 0.0
    %1191 = vmatpush1.msra.mxu0 0.0
    %1192 = vmatprep.subr.mxu0 0.0
    %1193 = vmatpush1.msra.mxu0 0.0
    %1194 = vmatprep.subr.mxu0 0.0
    %1195 = vmatpush1.msra.mxu0 0.0
    %1196 = vmatprep.subr.mxu0 0.0
    %1197 = vmatpush1.msra.mxu0 0.0
    %1198 = vmatprep.subr.mxu0 0.0
    %1199 = vmatpush1.msra.mxu0 0.0
    %1200 = vmatprep.subr.mxu0 0.0
    %1201 = vmatpush1.msra.mxu0 0.0
    %1202 = vmatprep.subr.mxu0 0.0
    %1203 = vmatpush1.msra.mxu0 0.0
    %1204 = vmatprep.subr.mxu0 0.0
    %1205 = vmatpush1.msra.mxu0 0.0
    %1206 = vmatprep.subr.mxu0 0.0
    %1207 = vmatpush1.msra.mxu0 0.0
    %1208 = vmatprep.subr.mxu0 0.0
    %1209 = vmatpush1.msra.mxu0 0.0
    %1210 = vmatprep.subr.mxu0 0.0
    %1211 = vmatpush1.msra.mxu0 0.0
    %1212 = vmatprep.subr.mxu0 0.0
    %1213 = vmatpush1.msra.mxu0 0.0
    %1214 = vmatprep.subr.mxu0 0.0
    %1215 = vmatpush1.msra.mxu0 0.0
    %1216 = vmatprep.subr.mxu0 0.0
    %1217 = vmatpush1.msra.mxu0 0.0
    %1218 = vmatprep.subr.mxu0 0.0
    %1219 = vmatpush1.msra.mxu0 0.0
    %1220 = vmatprep.subr.mxu0 0.0
    %1221 = vmatpush1.msra.mxu0 0.0
    %1222 = vmatprep.subr.mxu0 0.0
    %1223 = vmatpush1.msra.mxu0 0.0
    %1224 = vmatprep.subr.mxu0 0.0
    %1225 = vmatpush1.msra.mxu0 0.0
    %1226 = vmatprep.subr.mxu0 0.0
    %1227 = vmatpush1.msra.mxu0 0.0
    %1228 = vmatprep.subr.mxu0 0.0
    %1229 = vmatpush1.msra.mxu0 0.0
    %1230 = vmatprep.subr.mxu0 0.0
    %1231 = vmatpush1.msra.mxu0 0.0
    %1232 = vmatprep.subr.mxu0 0.0
    %1233 = vmatpush1.msra.mxu0 0.0
    %1234 = vmatprep.subr.mxu0 0.0
    %1235 = vmatpush1.msra.mxu0 0.0
    %1236 = vmatprep.mubr.f32.mxu0 0.0
    %1237 = vmatmul.mubr.f32.gmra.mrb[0].mxu0 %v1099
    %v1238 = vpop.f32.mrb[0].mxu0
    %v1239 = vadd.f32 0.0, %v1238
    %v1240 = vpop.f32.mrb[0].mxu0
    %v1241 = vadd.f32 0.0, %v1240
    %1242 = vdwg.mxu0
    %1243 = vmatprep.subr.mxu0 %v1085
    %1244 = vmatpush1.msra.mxu0 %v1091
    %1245 = vmatprep.subr.mxu0 0.0
    %1246 = vmatpush1.msra.mxu0 0.0
    %1247 = vmatprep.subr.mxu0 0.0
    %1248 = vmatpush1.msra.mxu0 0.0
    %1249 = vmatprep.subr.mxu0 0.0
    %1250 = vmatpush1.msra.mxu0 0.0
    %1251 = vmatprep.subr.mxu0 0.0
    %1252 = vmatpush1.msra.mxu0 0.0
    %1253 = vmatprep.subr.mxu0 0.0
    %1254 = vmatpush1.msra.mxu0 0.0
    %1255 = vmatprep.subr.mxu0 0.0
    %1256 = vmatpush1.msra.mxu0 0.0
    %1257 = vmatprep.subr.mxu0 0.0
    %1258 = vmatpush1.msra.mxu0 0.0
    %1259 = vmatprep.subr.mxu0 0.0
    %1260 = vmatpush1.msra.mxu0 0.0
    %1261 = vmatprep.subr.mxu0 0.0
    %1262 = vmatpush1.msra.mxu0 0.0
    %1263 = vmatprep.subr.mxu0 0.0
    %1264 = vmatpush1.msra.mxu0 0.0
    %1265 = vmatprep.subr.mxu0 0.0
    %1266 = vmatpush1.msra.mxu0 0.0
    %1267 = vmatprep.subr.mxu0 0.0
    %1268 = vmatpush1.msra.mxu0 0.0
    %1269 = vmatprep.subr.mxu0 0.0
    %1270 = vmatpush1.msra.mxu0 0.0
    %1271 = vmatprep.subr.mxu0 0.0
    %1272 = vmatpush1.msra.mxu0 0.0
    %1273 = vmatprep.subr.mxu0 0.0
    %1274 = vmatpush1.msra.mxu0 0.0
    %1275 = vmatprep.subr.mxu0 0.0
    %1276 = vmatpush1.msra.mxu0 0.0
    %1277 = vmatprep.subr.mxu0 0.0
    %1278 = vmatpush1.msra.mxu0 0.0
    %1279 = vmatprep.subr.mxu0 0.0
    %1280 = vmatpush1.msra.mxu0 0.0
    %1281 = vmatprep.subr.mxu0 0.0
    %1282 = vmatpush1.msra.mxu0 0.0
    %1283 = vmatprep.subr.mxu0 0.0
    %1284 = vmatpush1.msra.mxu0 0.0
    %1285 = vmatprep.subr.mxu0 0.0
    %1286 = vmatpush1.msra.mxu0 0.0
    %1287 = vmatprep.subr.mxu0 0.0
    %1288 = vmatpush1.msra.mxu0 0.0
    %1289 = vmatprep.subr.mxu0 0.0
    %1290 = vmatpush1.msra.mxu0 0.0
    %1291 = vmatprep.subr.mxu0 0.0
    %1292 = vmatpush1.msra.mxu0 0.0
    %1293 = vmatprep.subr.mxu0 0.0
    %1294 = vmatpush1.msra.mxu0 0.0
    %1295 = vmatprep.subr.mxu0 0.0
    %1296 = vmatpush1.msra.mxu0 0.0
    %1297 = vmatprep.subr.mxu0 0.0
    %1298 = vmatpush1.msra.mxu0 0.0
    %1299 = vmatprep.subr.mxu0 0.0
    %1300 = vmatpush1.msra.mxu0 0.0
    %1301 = vmatprep.subr.mxu0 0.0
    %1302 = vmatpush1.msra.mxu0 0.0
    %1303 = vmatprep.subr.mxu0 0.0
    %1304 = vmatpush1.msra.mxu0 0.0
    %1305 = vmatprep.subr.mxu0 0.0
    %1306 = vmatpush1.msra.mxu0 0.0
    %1307 = vmatprep.mubr.f32.mxu0 0.0
    %1308 = vmatmul.mubr.f32.gmra.mrb[0].mxu0 %v1099
    %v1309 = vpop.f32.mrb[0].mxu0
    %v1310 = vadd.f32 0.0, %v1309
    %v1311 = vpop.f32.mrb[0].mxu0
    %v1312 = vadd.f32 0.0, %v1311
    %1313 = vdwg.mxu0
    %v1314 = vadd.f32 %v1066, %v1168
    %v1315 = vadd.f32 %v1067, %v1170
    %v1316 = vadd.f32 %v1068, %v1239
    %v1317 = vadd.f32 %v1069, %v1241
    %v1318 = vadd.f32 %v1070, %v1310
    %v1319 = vadd.f32 %v1071, %v1312
    %s1320 = scalar_lea.vmem %s0, 40
    %v1321 = vld [vmem:[%s1320] sm:$0xff]
    %1322 = vrot.lane.b32.xlu0 %v105, 108
    %v1323 = vpop.permute.xlu0 %1322
    %1324 = vrot.lane.b32.xlu0 %v106, 108
    %v1325 = vpop.permute.xlu0 %1324
    %1326 = vrot.lane.b32.xlu0 %v107, 108
    %v1327 = vpop.permute.xlu0 %1326
    %1328 = vrot.lane.b32.xlu0 %v108, 108
    %v1329 = vpop.permute.xlu0 %1328
    %1330 = vrot.lane.b32.xlu0 %v109, 108
    %v1331 = vpop.permute.xlu0 %1330
    %1332 = vrot.lane.b32.xlu0 %v110, 108
    %v1333 = vpop.permute.xlu0 %1332
    %vm1334 = vcmask 883712
    %v1335 = vsel %vm1334, %v1323, %v1325
    %v1336 = vsel %vm1334, %v1325, %v1327
    %v1337 = vsel %vm1334, %v1327, %v1329
    %v1338 = vsel %vm1334, %v1329, %v1331
    %v1339 = vsel %vm1334, %v1331, %v1333
    %v1347 = vsel %vm143, %v1321, 0
    %1349 = vmatprep.subr.mxu0 %v1336
    %1350 = vmatpush1.msra.mxu0 %v1335
    %1351 = vmatprep.subr.mxu0 0.0
    %1352 = vmatpush1.msra.mxu0 0.0
    %1353 = vmatprep.subr.mxu0 0.0
    %1354 = vmatpush1.msra.mxu0 0.0
    %1355 = vmatprep.subr.mxu0 0.0
    %1356 = vmatpush1.msra.mxu0 0.0
    %1357 = vmatprep.subr.mxu0 0.0
    %1358 = vmatpush1.msra.mxu0 0.0
    %1359 = vmatprep.subr.mxu0 0.0
    %1360 = vmatpush1.msra.mxu0 0.0
    %1361 = vmatprep.subr.mxu0 0.0
    %1362 = vmatpush1.msra.mxu0 0.0
    %1363 = vmatprep.subr.mxu0 0.0
    %1364 = vmatpush1.msra.mxu0 0.0
    %1365 = vmatprep.subr.mxu0 0.0
    %1366 = vmatpush1.msra.mxu0 0.0
    %1367 = vmatprep.subr.mxu0 0.0
    %1368 = vmatpush1.msra.mxu0 0.0
    %1369 = vmatprep.subr.mxu0 0.0
    %1370 = vmatpush1.msra.mxu0 0.0
    %1371 = vmatprep.subr.mxu0 0.0
    %1372 = vmatpush1.msra.mxu0 0.0
    %1373 = vmatprep.subr.mxu0 0.0
    %1374 = vmatpush1.msra.mxu0 0.0
    %1375 = vmatprep.subr.mxu0 0.0
    %1376 = vmatpush1.msra.mxu0 0.0
    %1377 = vmatprep.subr.mxu0 0.0
    %1378 = vmatpush1.msra.mxu0 0.0
    %1379 = vmatprep.subr.mxu0 0.0
    %1380 = vmatpush1.msra.mxu0 0.0
    %1381 = vmatprep.subr.mxu0 0.0
    %1382 = vmatpush1.msra.mxu0 0.0
    %1383 = vmatprep.subr.mxu0 0.0
    %1384 = vmatpush1.msra.mxu0 0.0
    %1385 = vmatprep.subr.mxu0 0.0
    %1386 = vmatpush1.msra.mxu0 0.0
    %1387 = vmatprep.subr.mxu0 0.0
    %1388 = vmatpush1.msra.mxu0 0.0
    %1389 = vmatprep.subr.mxu0 0.0
    %1390 = vmatpush1.msra.mxu0 0.0
    %1391 = vmatprep.subr.mxu0 0.0
    %1392 = vmatpush1.msra.mxu0 0.0
    %1393 = vmatprep.subr.mxu0 0.0
    %1394 = vmatpush1.msra.mxu0 0.0
    %1395 = vmatprep.subr.mxu0 0.0
    %1396 = vmatpush1.msra.mxu0 0.0
    %1397 = vmatprep.subr.mxu0 0.0
    %1398 = vmatpush1.msra.mxu0 0.0
    %1399 = vmatprep.subr.mxu0 0.0
    %1400 = vmatpush1.msra.mxu0 0.0
    %1401 = vmatprep.subr.mxu0 0.0
    %1402 = vmatpush1.msra.mxu0 0.0
    %1403 = vmatprep.subr.mxu0 0.0
    %1404 = vmatpush1.msra.mxu0 0.0
    %1405 = vmatprep.subr.mxu0 0.0
    %1406 = vmatpush1.msra.mxu0 0.0
    %1407 = vmatprep.subr.mxu0 0.0
    %1408 = vmatpush1.msra.mxu0 0.0
    %1409 = vmatprep.subr.mxu0 0.0
    %1410 = vmatpush1.msra.mxu0 0.0
    %1411 = vmatprep.subr.mxu0 0.0
    %1412 = vmatpush1.msra.mxu0 0.0
    %1413 = vmatprep.mubr.f32.mxu0 0.0
    %1414 = vmatmul.mubr.f32.gmra.mrb[0].mxu0 %v1347
    %v1415 = vpop.f32.mrb[0].mxu0
    %v1416 = vadd.f32 0.0, %v1415
    %v1417 = vpop.f32.mrb[0].mxu0
    %v1418 = vadd.f32 0.0, %v1417
    %1419 = vdwg.mxu0
    %1420 = vmatprep.subr.mxu0 %v1338
    %1421 = vmatpush1.msra.mxu0 %v1337
    %1422 = vmatprep.subr.mxu0 0.0
    %1423 = vmatpush1.msra.mxu0 0.0
    %1424 = vmatprep.subr.mxu0 0.0
    %1425 = vmatpush1.msra.mxu0 0.0
    %1426 = vmatprep.subr.mxu0 0.0
    %1427 = vmatpush1.msra.mxu0 0.0
    %1428 = vmatprep.subr.mxu0 0.0
    %1429 = vmatpush1.msra.mxu0 0.0
    %1430 = vmatprep.subr.mxu0 0.0
    %1431 = vmatpush1.msra.mxu0 0.0
    %1432 = vmatprep.subr.mxu0 0.0
    %1433 = vmatpush1.msra.mxu0 0.0
    %1434 = vmatprep.subr.mxu0 0.0
    %1435 = vmatpush1.msra.mxu0 0.0
    %1436 = vmatprep.subr.mxu0 0.0
    %1437 = vmatpush1.msra.mxu0 0.0
    %1438 = vmatprep.subr.mxu0 0.0
    %1439 = vmatpush1.msra.mxu0 0.0
    %1440 = vmatprep.subr.mxu0 0.0
    %1441 = vmatpush1.msra.mxu0 0.0
    %1442 = vmatprep.subr.mxu0 0.0
    %1443 = vmatpush1.msra.mxu0 0.0
    %1444 = vmatprep.subr.mxu0 0.0
    %1445 = vmatpush1.msra.mxu0 0.0
    %1446 = vmatprep.subr.mxu0 0.0
    %1447 = vmatpush1.msra.mxu0 0.0
    %1448 = vmatprep.subr.mxu0 0.0
    %1449 = vmatpush1.msra.mxu0 0.0
    %1450 = vmatprep.subr.mxu0 0.0
    %1451 = vmatpush1.msra.mxu0 0.0
    %1452 = vmatprep.subr.mxu0 0.0
    %1453 = vmatpush1.msra.mxu0 0.0
    %1454 = vmatprep.subr.mxu0 0.0
    %1455 = vmatpush1.msra.mxu0 0.0
    %1456 = vmatprep.subr.mxu0 0.0
    %1457 = vmatpush1.msra.mxu0 0.0
    %1458 = vmatprep.subr.mxu0 0.0
    %1459 = vmatpush1.msra.mxu0 0.0
    %1460 = vmatprep.subr.mxu0 0.0
    %1461 = vmatpush1.msra.mxu0 0.0
    %1462 = vmatprep.subr.mxu0 0.0
    %1463 = vmatpush1.msra.mxu0 0.0
    %1464 = vmatprep.subr.mxu0 0.0
    %1465 = vmatpush1.msra.mxu0 0.0
    %1466 = vmatprep.subr.mxu0 0.0
    %1467 = vmatpush1.msra.mxu0 0.0
    %1468 = vmatprep.subr.mxu0 0.0
    %1469 = vmatpush1.msra.mxu0 0.0
    %1470 = vmatprep.subr.mxu0 0.0
    %1471 = vmatpush1.msra.mxu0 0.0
    %1472 = vmatprep.subr.mxu0 0.0
    %1473 = vmatpush1.msra.mxu0 0.0
    %1474 = vmatprep.subr.mxu0 0.0
    %1475 = vmatpush1.msra.mxu0 0.0
    %1476 = vmatprep.subr.mxu0 0.0
    %1477 = vmatpush1.msra.mxu0 0.0
    %1478 = vmatprep.subr.mxu0 0.0
    %1479 = vmatpush1.msra.mxu0 0.0
    %1480 = vmatprep.subr.mxu0 0.0
    %1481 = vmatpush1.msra.mxu0 0.0
    %1482 = vmatprep.subr.mxu0 0.0
    %1483 = vmatpush1.msra.mxu0 0.0
    %1484 = vmatprep.mubr.f32.mxu0 0.0
    %1485 = vmatmul.mubr.f32.gmra.mrb[0].mxu0 %v1347
    %v1486 = vpop.f32.mrb[0].mxu0
    %v1487 = vadd.f32 0.0, %v1486
    %v1488 = vpop.f32.mrb[0].mxu0
    %v1489 = vadd.f32 0.0, %v1488
    %1490 = vdwg.mxu0
    %1491 = vmatprep.subr.mxu0 %v1333
    %1492 = vmatpush1.msra.mxu0 %v1339
    %1493 = vmatprep.subr.mxu0 0.0
    %1494 = vmatpush1.msra.mxu0 0.0
    %1495 = vmatprep.subr.mxu0 0.0
    %1496 = vmatpush1.msra.mxu0 0.0
    %1497 = vmatprep.subr.mxu0 0.0
    %1498 = vmatpush1.msra.mxu0 0.0
    %1499 = vmatprep.subr.mxu0 0.0
    %1500 = vmatpush1.msra.mxu0 0.0
    %1501 = vmatprep.subr.mxu0 0.0
    %1502 = vmatpush1.msra.mxu0 0.0
    %1503 = vmatprep.subr.mxu0 0.0
    %1504 = vmatpush1.msra.mxu0 0.0
    %1505 = vmatprep.subr.mxu0 0.0
    %1506 = vmatpush1.msra.mxu0 0.0
    %1507 = vmatprep.subr.mxu0 0.0
    %1508 = vmatpush1.msra.mxu0 0.0
    %1509 = vmatprep.subr.mxu0 0.0
    %1510 = vmatpush1.msra.mxu0 0.0
    %1511 = vmatprep.subr.mxu0 0.0
    %1512 = vmatpush1.msra.mxu0 0.0
    %1513 = vmatprep.subr.mxu0 0.0
    %1514 = vmatpush1.msra.mxu0 0.0
    %1515 = vmatprep.subr.mxu0 0.0
    %1516 = vmatpush1.msra.mxu0 0.0
    %1517 = vmatprep.subr.mxu0 0.0
    %1518 = vmatpush1.msra.mxu0 0.0
    %1519 = vmatprep.subr.mxu0 0.0
    %1520 = vmatpush1.msra.mxu0 0.0
    %1521 = vmatprep.subr.mxu0 0.0
    %1522 = vmatpush1.msra.mxu0 0.0
    %1523 = vmatprep.subr.mxu0 0.0
    %1524 = vmatpush1.msra.mxu0 0.0
    %1525 = vmatprep.subr.mxu0 0.0
    %1526 = vmatpush1.msra.mxu0 0.0
    %1527 = vmatprep.subr.mxu0 0.0
    %1528 = vmatpush1.msra.mxu0 0.0
    %1529 = vmatprep.subr.mxu0 0.0
    %1530 = vmatpush1.msra.mxu0 0.0
    %1531 = vmatprep.subr.mxu0 0.0
    %1532 = vmatpush1.msra.mxu0 0.0
    %1533 = vmatprep.subr.mxu0 0.0
    %1534 = vmatpush1.msra.mxu0 0.0
    %1535 = vmatprep.subr.mxu0 0.0
    %1536 = vmatpush1.msra.mxu0 0.0
    %1537 = vmatprep.subr.mxu0 0.0
    %1538 = vmatpush1.msra.mxu0 0.0
    %1539 = vmatprep.subr.mxu0 0.0
    %1540 = vmatpush1.msra.mxu0 0.0
    %1541 = vmatprep.subr.mxu0 0.0
    %1542 = vmatpush1.msra.mxu0 0.0
    %1543 = vmatprep.subr.mxu0 0.0
    %1544 = vmatpush1.msra.mxu0 0.0
    %1545 = vmatprep.subr.mxu0 0.0
    %1546 = vmatpush1.msra.mxu0 0.0
    %1547 = vmatprep.subr.mxu0 0.0
    %1548 = vmatpush1.msra.mxu0 0.0
    %1549 = vmatprep.subr.mxu0 0.0
    %1550 = vmatpush1.msra.mxu0 0.0
    %1551 = vmatprep.subr.mxu0 0.0
    %1552 = vmatpush1.msra.mxu0 0.0
    %1553 = vmatprep.subr.mxu0 0.0
    %1554 = vmatpush1.msra.mxu0 0.0
    %1555 = vmatprep.mubr.f32.mxu0 0.0
    %1556 = vmatmul.mubr.f32.gmra.mrb[0].mxu0 %v1347
    %v1557 = vpop.f32.mrb[0].mxu0
    %v1558 = vadd.f32 0.0, %v1557
    %v1559 = vpop.f32.mrb[0].mxu0
    %v1560 = vadd.f32 0.0, %v1559
    %1561 = vdwg.mxu0
    %v1562 = vadd.f32 %v1314, %v1416
    %v1563 = vadd.f32 %v1315, %v1418
    %v1564 = vadd.f32 %v1316, %v1487
    %v1565 = vadd.f32 %v1317, %v1489
    %v1566 = vadd.f32 %v1318, %v1558
    %v1567 = vadd.f32 %v1319, %v1560
    %s1568 = scalar_lea.vmem %s0, 48
    %v1569 = vld [vmem:[%s1568] sm:$0xff]
    %1570 = vrot.lane.b32.xlu0 %v105, 92
    %v1571 = vpop.permute.xlu0 %1570
    %1572 = vrot.lane.b32.xlu0 %v106, 92
    %v1573 = vpop.permute.xlu0 %1572
    %1574 = vrot.lane.b32.xlu0 %v107, 92
    %v1575 = vpop.permute.xlu0 %1574
    %1576 = vrot.lane.b32.xlu0 %v108, 92
    %v1577 = vpop.permute.xlu0 %1576
    %1578 = vrot.lane.b32.xlu0 %v109, 92
    %v1579 = vpop.permute.xlu0 %1578
    %1580 = vrot.lane.b32.xlu0 %v110, 92
    %v1581 = vpop.permute.xlu0 %1580
    %vm1582 = vcmask 752640
    %v1583 = vsel %vm1582, %v1571, %v1573
    %v1584 = vsel %vm1582, %v1573, %v1575
    %v1585 = vsel %vm1582, %v1575, %v1577
    %v1586 = vsel %vm1582, %v1577, %v1579
    %v1587 = vsel %vm1582, %v1579, %v1581
    %v1595 = vsel %vm143, %v1569, 0
    %1597 = vmatprep.subr.mxu0 %v1584
    %1598 = vmatpush1.msra.mxu0 %v1583
    %1599 = vmatprep.subr.mxu0 0.0
    %1600 = vmatpush1.msra.mxu0 0.0
    %1601 = vmatprep.subr.mxu0 0.0
    %1602 = vmatpush1.msra.mxu0 0.0
    %1603 = vmatprep.subr.mxu0 0.0
    %1604 = vmatpush1.msra.mxu0 0.0
    %1605 = vmatprep.subr.mxu0 0.0
    %1606 = vmatpush1.msra.mxu0 0.0
    %1607 = vmatprep.subr.mxu0 0.0
    %1608 = vmatpush1.msra.mxu0 0.0
    %1609 = vmatprep.subr.mxu0 0.0
    %1610 = vmatpush1.msra.mxu0 0.0
    %1611 = vmatprep.subr.mxu0 0.0
    %1612 = vmatpush1.msra.mxu0 0.0
    %1613 = vmatprep.subr.mxu0 0.0
    %1614 = vmatpush1.msra.mxu0 0.0
    %1615 = vmatprep.subr.mxu0 0.0
    %1616 = vmatpush1.msra.mxu0 0.0
    %1617 = vmatprep.subr.mxu0 0.0
    %1618 = vmatpush1.msra.mxu0 0.0
    %1619 = vmatprep.subr.mxu0 0.0
    %1620 = vmatpush1.msra.mxu0 0.0
    %1621 = vmatprep.subr.mxu0 0.0
    %1622 = vmatpush1.msra.mxu0 0.0
    %1623 = vmatprep.subr.mxu0 0.0
    %1624 = vmatpush1.msra.mxu0 0.0
    %1625 = vmatprep.subr.mxu0 0.0
    %1626 = vmatpush1.msra.mxu0 0.0
    %1627 = vmatprep.subr.mxu0 0.0
    %1628 = vmatpush1.msra.mxu0 0.0
    %1629 = vmatprep.subr.mxu0 0.0
    %1630 = vmatpush1.msra.mxu0 0.0
    %1631 = vmatprep.subr.mxu0 0.0
    %1632 = vmatpush1.msra.mxu0 0.0
    %1633 = vmatprep.subr.mxu0 0.0
    %1634 = vmatpush1.msra.mxu0 0.0
    %1635 = vmatprep.subr.mxu0 0.0
    %1636 = vmatpush1.msra.mxu0 0.0
    %1637 = vmatprep.subr.mxu0 0.0
    %1638 = vmatpush1.msra.mxu0 0.0
    %1639 = vmatprep.subr.mxu0 0.0
    %1640 = vmatpush1.msra.mxu0 0.0
    %1641 = vmatprep.subr.mxu0 0.0
    %1642 = vmatpush1.msra.mxu0 0.0
    %1643 = vmatprep.subr.mxu0 0.0
    %1644 = vmatpush1.msra.mxu0 0.0
    %1645 = vmatprep.subr.mxu0 0.0
    %1646 = vmatpush1.msra.mxu0 0.0
    %1647 = vmatprep.subr.mxu0 0.0
    %1648 = vmatpush1.msra.mxu0 0.0
    %1649 = vmatprep.subr.mxu0 0.0
    %1650 = vmatpush1.msra.mxu0 0.0
    %1651 = vmatprep.subr.mxu0 0.0
    %1652 = vmatpush1.msra.mxu0 0.0
    %1653 = vmatprep.subr.mxu0 0.0
    %1654 = vmatpush1.msra.mxu0 0.0
    %1655 = vmatprep.subr.mxu0 0.0
    %1656 = vmatpush1.msra.mxu0 0.0
    %1657 = vmatprep.subr.mxu0 0.0
    %1658 = vmatpush1.msra.mxu0 0.0
    %1659 = vmatprep.subr.mxu0 0.0
    %1660 = vmatpush1.msra.mxu0 0.0
    %1661 = vmatprep.mubr.f32.mxu0 0.0
    %1662 = vmatmul.mubr.f32.gmra.mrb[0].mxu0 %v1595
    %v1663 = vpop.f32.mrb[0].mxu0
    %v1664 = vadd.f32 0.0, %v1663
    %v1665 = vpop.f32.mrb[0].mxu0
    %v1666 = vadd.f32 0.0, %v1665
    %1667 = vdwg.mxu0
    %1668 = vmatprep.subr.mxu0 %v1586
    %1669 = vmatpush1.msra.mxu0 %v1585
    %1670 = vmatprep.subr.mxu0 0.0
    %1671 = vmatpush1.msra.mxu0 0.0
    %1672 = vmatprep.subr.mxu0 0.0
    %1673 = vmatpush1.msra.mxu0 0.0
    %1674 = vmatprep.subr.mxu0 0.0
    %1675 = vmatpush1.msra.mxu0 0.0
    %1676 = vmatprep.subr.mxu0 0.0
    %1677 = vmatpush1.msra.mxu0 0.0
    %1678 = vmatprep.subr.mxu0 0.0
    %1679 = vmatpush1.msra.mxu0 0.0
    %1680 = vmatprep.subr.mxu0 0.0
    %1681 = vmatpush1.msra.mxu0 0.0
    %1682 = vmatprep.subr.mxu0 0.0
    %1683 = vmatpush1.msra.mxu0 0.0
    %1684 = vmatprep.subr.mxu0 0.0
    %1685 = vmatpush1.msra.mxu0 0.0
    %1686 = vmatprep.subr.mxu0 0.0
    %1687 = vmatpush1.msra.mxu0 0.0
    %1688 = vmatprep.subr.mxu0 0.0
    %1689 = vmatpush1.msra.mxu0 0.0
    %1690 = vmatprep.subr.mxu0 0.0
    %1691 = vmatpush1.msra.mxu0 0.0
    %1692 = vmatprep.subr.mxu0 0.0
    %1693 = vmatpush1.msra.mxu0 0.0
    %1694 = vmatprep.subr.mxu0 0.0
    %1695 = vmatpush1.msra.mxu0 0.0
    %1696 = vmatprep.subr.mxu0 0.0
    %1697 = vmatpush1.msra.mxu0 0.0
    %1698 = vmatprep.subr.mxu0 0.0
    %1699 = vmatpush1.msra.mxu0 0.0
    %1700 = vmatprep.subr.mxu0 0.0
    %1701 = vmatpush1.msra.mxu0 0.0
    %1702 = vmatprep.subr.mxu0 0.0
    %1703 = vmatpush1.msra.mxu0 0.0
    %1704 = vmatprep.subr.mxu0 0.0
    %1705 = vmatpush1.msra.mxu0 0.0
    %1706 = vmatprep.subr.mxu0 0.0
    %1707 = vmatpush1.msra.mxu0 0.0
    %1708 = vmatprep.subr.mxu0 0.0
    %1709 = vmatpush1.msra.mxu0 0.0
    %1710 = vmatprep.subr.mxu0 0.0
    %1711 = vmatpush1.msra.mxu0 0.0
    %1712 = vmatprep.subr.mxu0 0.0
    %1713 = vmatpush1.msra.mxu0 0.0
    %1714 = vmatprep.subr.mxu0 0.0
    %1715 = vmatpush1.msra.mxu0 0.0
    %1716 = vmatprep.subr.mxu0 0.0
    %1717 = vmatpush1.msra.mxu0 0.0
    %1718 = vmatprep.subr.mxu0 0.0
    %1719 = vmatpush1.msra.mxu0 0.0
    %1720 = vmatprep.subr.mxu0 0.0
    %1721 = vmatpush1.msra.mxu0 0.0
    %1722 = vmatprep.subr.mxu0 0.0
    %1723 = vmatpush1.msra.mxu0 0.0
    %1724 = vmatprep.subr.mxu0 0.0
    %1725 = vmatpush1.msra.mxu0 0.0
    %1726 = vmatprep.subr.mxu0 0.0
    %1727 = vmatpush1.msra.mxu0 0.0
    %1728 = vmatprep.subr.mxu0 0.0
    %1729 = vmatpush1.msra.mxu0 0.0
    %1730 = vmatprep.subr.mxu0 0.0
    %1731 = vmatpush1.msra.mxu0 0.0
    %1732 = vmatprep.mubr.f32.mxu0 0.0
    %1733 = vmatmul.mubr.f32.gmra.mrb[0].mxu0 %v1595
    %v1734 = vpop.f32.mrb[0].mxu0
    %v1735 = vadd.f32 0.0, %v1734
    %v1736 = vpop.f32.mrb[0].mxu0
    %v1737 = vadd.f32 0.0, %v1736
    %1738 = vdwg.mxu0
    %1739 = vmatprep.subr.mxu0 %v1581
    %1740 = vmatpush1.msra.mxu0 %v1587
    %1741 = vmatprep.subr.mxu0 0.0
    %1742 = vmatpush1.msra.mxu0 0.0
    %1743 = vmatprep.subr.mxu0 0.0
    %1744 = vmatpush1.msra.mxu0 0.0
    %1745 = vmatprep.subr.mxu0 0.0
    %1746 = vmatpush1.msra.mxu0 0.0
    %1747 = vmatprep.subr.mxu0 0.0
    %1748 = vmatpush1.msra.mxu0 0.0
    %1749 = vmatprep.subr.mxu0 0.0
    %1750 = vmatpush1.msra.mxu0 0.0
    %1751 = vmatprep.subr.mxu0 0.0
    %1752 = vmatpush1.msra.mxu0 0.0
    %1753 = vmatprep.subr.mxu0 0.0
    %1754 = vmatpush1.msra.mxu0 0.0
    %1755 = vmatprep.subr.mxu0 0.0
    %1756 = vmatpush1.msra.mxu0 0.0
    %1757 = vmatprep.subr.mxu0 0.0
    %1758 = vmatpush1.msra.mxu0 0.0
    %1759 = vmatprep.subr.mxu0 0.0
    %1760 = vmatpush1.msra.mxu0 0.0
    %1761 = vmatprep.subr.mxu0 0.0
    %1762 = vmatpush1.msra.mxu0 0.0
    %1763 = vmatprep.subr.mxu0 0.0
    %1764 = vmatpush1.msra.mxu0 0.0
    %1765 = vmatprep.subr.mxu0 0.0
    %1766 = vmatpush1.msra.mxu0 0.0
    %1767 = vmatprep.subr.mxu0 0.0
    %1768 = vmatpush1.msra.mxu0 0.0
    %1769 = vmatprep.subr.mxu0 0.0
    %1770 = vmatpush1.msra.mxu0 0.0
    %1771 = vmatprep.subr.mxu0 0.0
    %1772 = vmatpush1.msra.mxu0 0.0
    %1773 = vmatprep.subr.mxu0 0.0
    %1774 = vmatpush1.msra.mxu0 0.0
    %1775 = vmatprep.subr.mxu0 0.0
    %1776 = vmatpush1.msra.mxu0 0.0
    %1777 = vmatprep.subr.mxu0 0.0
    %1778 = vmatpush1.msra.mxu0 0.0
    %1779 = vmatprep.subr.mxu0 0.0
    %1780 = vmatpush1.msra.mxu0 0.0
    %1781 = vmatprep.subr.mxu0 0.0
    %1782 = vmatpush1.msra.mxu0 0.0
    %1783 = vmatprep.subr.mxu0 0.0
    %1784 = vmatpush1.msra.mxu0 0.0
    %1785 = vmatprep.subr.mxu0 0.0
    %1786 = vmatpush1.msra.mxu0 0.0
    %1787 = vmatprep.subr.mxu0 0.0
    %1788 = vmatpush1.msra.mxu0 0.0
    %1789 = vmatprep.subr.mxu0 0.0
    %1790 = vmatpush1.msra.mxu0 0.0
    %1791 = vmatprep.subr.mxu0 0.0
    %1792 = vmatpush1.msra.mxu0 0.0
    %1793 = vmatprep.subr.mxu0 0.0
    %1794 = vmatpush1.msra.mxu0 0.0
    %1795 = vmatprep.subr.mxu0 0.0
    %1796 = vmatpush1.msra.mxu0 0.0
    %1797 = vmatprep.subr.mxu0 0.0
    %1798 = vmatpush1.msra.mxu0 0.0
    %1799 = vmatprep.subr.mxu0 0.0
    %1800 = vmatpush1.msra.mxu0 0.0
    %1801 = vmatprep.subr.mxu0 0.0
    %1802 = vmatpush1.msra.mxu0 0.0
    %1803 = vmatprep.mubr.f32.mxu0 0.0
    %1804 = vmatmul.mubr.f32.gmra.mrb[0].mxu0 %v1595
    %v1805 = vpop.f32.mrb[0].mxu0
    %v1806 = vadd.f32 0.0, %v1805
    %v1807 = vpop.f32.mrb[0].mxu0
    %v1808 = vadd.f32 0.0, %v1807
    %1809 = vdwg.mxu0
    %v1810 = vadd.f32 %v1562, %v1664
    %v1811 = vadd.f32 %v1563, %v1666
    %v1812 = vadd.f32 %v1564, %v1735
    %v1813 = vadd.f32 %v1565, %v1737
    %v1814 = vadd.f32 %v1566, %v1806
    %v1815 = vadd.f32 %v1567, %v1808
    %s1816 = scalar_lea.vmem %s0, 56
    %v1817 = vld [vmem:[%s1816] sm:$0xff]
    %1818 = vrot.lane.b32.xlu0 %v105, 91
    %v1819 = vpop.permute.xlu0 %1818
    %1820 = vrot.lane.b32.xlu0 %v106, 91
    %v1821 = vpop.permute.xlu0 %1820
    %1822 = vrot.lane.b32.xlu0 %v107, 91
    %v1823 = vpop.permute.xlu0 %1822
    %1824 = vrot.lane.b32.xlu0 %v108, 91
    %v1825 = vpop.permute.xlu0 %1824
    %1826 = vrot.lane.b32.xlu0 %v109, 91
    %v1827 = vpop.permute.xlu0 %1826
    %1828 = vrot.lane.b32.xlu0 %v110, 91
    %v1829 = vpop.permute.xlu0 %1828
    %vm1830 = vcmask 744448
    %v1831 = vsel %vm1830, %v1819, %v1821
    %v1832 = vsel %vm1830, %v1821, %v1823
    %v1833 = vsel %vm1830, %v1823, %v1825
    %v1834 = vsel %vm1830, %v1825, %v1827
    %v1835 = vsel %vm1830, %v1827, %v1829
    %v1843 = vsel %vm143, %v1817, 0
    %1845 = vmatprep.subr.mxu0 %v1832
    %1846 = vmatpush1.msra.mxu0 %v1831
    %1847 = vmatprep.subr.mxu0 0.0
    %1848 = vmatpush1.msra.mxu0 0.0
    %1849 = vmatprep.subr.mxu0 0.0
    %1850 = vmatpush1.msra.mxu0 0.0
    %1851 = vmatprep.subr.mxu0 0.0
    %1852 = vmatpush1.msra.mxu0 0.0
    %1853 = vmatprep.subr.mxu0 0.0
    %1854 = vmatpush1.msra.mxu0 0.0
    %1855 = vmatprep.subr.mxu0 0.0
    %1856 = vmatpush1.msra.mxu0 0.0
    %1857 = vmatprep.subr.mxu0 0.0
    %1858 = vmatpush1.msra.mxu0 0.0
    %1859 = vmatprep.subr.mxu0 0.0
    %1860 = vmatpush1.msra.mxu0 0.0
    %1861 = vmatprep.subr.mxu0 0.0
    %1862 = vmatpush1.msra.mxu0 0.0
    %1863 = vmatprep.subr.mxu0 0.0
    %1864 = vmatpush1.msra.mxu0 0.0
    %1865 = vmatprep.subr.mxu0 0.0
    %1866 = vmatpush1.msra.mxu0 0.0
    %1867 = vmatprep.subr.mxu0 0.0
    %1868 = vmatpush1.msra.mxu0 0.0
    %1869 = vmatprep.subr.mxu0 0.0
    %1870 = vmatpush1.msra.mxu0 0.0
    %1871 = vmatprep.subr.mxu0 0.0
    %1872 = vmatpush1.msra.mxu0 0.0
    %1873 = vmatprep.subr.mxu0 0.0
    %1874 = vmatpush1.msra.mxu0 0.0
    %1875 = vmatprep.subr.mxu0 0.0
    %1876 = vmatpush1.msra.mxu0 0.0
    %1877 = vmatprep.subr.mxu0 0.0
    %1878 = vmatpush1.msra.mxu0 0.0
    %1879 = vmatprep.subr.mxu0 0.0
    %1880 = vmatpush1.msra.mxu0 0.0
    %1881 = vmatprep.subr.mxu0 0.0
    %1882 = vmatpush1.msra.mxu0 0.0
    %1883 = vmatprep.subr.mxu0 0.0
    %1884 = vmatpush1.msra.mxu0 0.0
    %1885 = vmatprep.subr.mxu0 0.0
    %1886 = vmatpush1.msra.mxu0 0.0
    %1887 = vmatprep.subr.mxu0 0.0
    %1888 = vmatpush1.msra.mxu0 0.0
    %1889 = vmatprep.subr.mxu0 0.0
    %1890 = vmatpush1.msra.mxu0 0.0
    %1891 = vmatprep.subr.mxu0 0.0
    %1892 = vmatpush1.msra.mxu0 0.0
    %1893 = vmatprep.subr.mxu0 0.0
    %1894 = vmatpush1.msra.mxu0 0.0
    %1895 = vmatprep.subr.mxu0 0.0
    %1896 = vmatpush1.msra.mxu0 0.0
    %1897 = vmatprep.subr.mxu0 0.0
    %1898 = vmatpush1.msra.mxu0 0.0
    %1899 = vmatprep.subr.mxu0 0.0
    %1900 = vmatpush1.msra.mxu0 0.0
    %1901 = vmatprep.subr.mxu0 0.0
    %1902 = vmatpush1.msra.mxu0 0.0
    %1903 = vmatprep.subr.mxu0 0.0
    %1904 = vmatpush1.msra.mxu0 0.0
    %1905 = vmatprep.subr.mxu0 0.0
    %1906 = vmatpush1.msra.mxu0 0.0
    %1907 = vmatprep.subr.mxu0 0.0
    %1908 = vmatpush1.msra.mxu0 0.0
    %1909 = vmatprep.mubr.f32.mxu0 0.0
    %1910 = vmatmul.mubr.f32.gmra.mrb[0].mxu0 %v1843
    %v1911 = vpop.f32.mrb[0].mxu0
    %v1912 = vadd.f32 0.0, %v1911
    %v1913 = vpop.f32.mrb[0].mxu0
    %v1914 = vadd.f32 0.0, %v1913
    %1915 = vdwg.mxu0
    %1916 = vmatprep.subr.mxu0 %v1834
    %1917 = vmatpush1.msra.mxu0 %v1833
    %1918 = vmatprep.subr.mxu0 0.0
    %1919 = vmatpush1.msra.mxu0 0.0
    %1920 = vmatprep.subr.mxu0 0.0
    %1921 = vmatpush1.msra.mxu0 0.0
    %1922 = vmatprep.subr.mxu0 0.0
    %1923 = vmatpush1.msra.mxu0 0.0
    %1924 = vmatprep.subr.mxu0 0.0
    %1925 = vmatpush1.msra.mxu0 0.0
    %1926 = vmatprep.subr.mxu0 0.0
    %1927 = vmatpush1.msra.mxu0 0.0
    %1928 = vmatprep.subr.mxu0 0.0
    %1929 = vmatpush1.msra.mxu0 0.0
    %1930 = vmatprep.subr.mxu0 0.0
    %1931 = vmatpush1.msra.mxu0 0.0
    %1932 = vmatprep.subr.mxu0 0.0
    %1933 = vmatpush1.msra.mxu0 0.0
    %1934 = vmatprep.subr.mxu0 0.0
    %1935 = vmatpush1.msra.mxu0 0.0
    %1936 = vmatprep.subr.mxu0 0.0
    %1937 = vmatpush1.msra.mxu0 0.0
    %1938 = vmatprep.subr.mxu0 0.0
    %1939 = vmatpush1.msra.mxu0 0.0
    %1940 = vmatprep.subr.mxu0 0.0
    %1941 = vmatpush1.msra.mxu0 0.0
    %1942 = vmatprep.subr.mxu0 0.0
    %1943 = vmatpush1.msra.mxu0 0.0
    %1944 = vmatprep.subr.mxu0 0.0
    %1945 = vmatpush1.msra.mxu0 0.0
    %1946 = vmatprep.subr.mxu0 0.0
    %1947 = vmatpush1.msra.mxu0 0.0
    %1948 = vmatprep.subr.mxu0 0.0
    %1949 = vmatpush1.msra.mxu0 0.0
    %1950 = vmatprep.subr.mxu0 0.0
    %1951 = vmatpush1.msra.mxu0 0.0
    %1952 = vmatprep.subr.mxu0 0.0
    %1953 = vmatpush1.msra.mxu0 0.0
    %1954 = vmatprep.subr.mxu0 0.0
    %1955 = vmatpush1.msra.mxu0 0.0
    %1956 = vmatprep.subr.mxu0 0.0
    %1957 = vmatpush1.msra.mxu0 0.0
    %1958 = vmatprep.subr.mxu0 0.0
    %1959 = vmatpush1.msra.mxu0 0.0
    %1960 = vmatprep.subr.mxu0 0.0
    %1961 = vmatpush1.msra.mxu0 0.0
    %1962 = vmatprep.subr.mxu0 0.0
    %1963 = vmatpush1.msra.mxu0 0.0
    %1964 = vmatprep.subr.mxu0 0.0
    %1965 = vmatpush1.msra.mxu0 0.0
    %1966 = vmatprep.subr.mxu0 0.0
    %1967 = vmatpush1.msra.mxu0 0.0
    %1968 = vmatprep.subr.mxu0 0.0
    %1969 = vmatpush1.msra.mxu0 0.0
    %1970 = vmatprep.subr.mxu0 0.0
    %1971 = vmatpush1.msra.mxu0 0.0
    %1972 = vmatprep.subr.mxu0 0.0
    %1973 = vmatpush1.msra.mxu0 0.0
    %1974 = vmatprep.subr.mxu0 0.0
    %1975 = vmatpush1.msra.mxu0 0.0
    %1976 = vmatprep.subr.mxu0 0.0
    %1977 = vmatpush1.msra.mxu0 0.0
    %1978 = vmatprep.subr.mxu0 0.0
    %1979 = vmatpush1.msra.mxu0 0.0
    %1980 = vmatprep.mubr.f32.mxu0 0.0
    %1981 = vmatmul.mubr.f32.gmra.mrb[0].mxu0 %v1843
    %v1982 = vpop.f32.mrb[0].mxu0
    %v1983 = vadd.f32 0.0, %v1982
    %v1984 = vpop.f32.mrb[0].mxu0
    %v1985 = vadd.f32 0.0, %v1984
    %1986 = vdwg.mxu0
    %1987 = vmatprep.subr.mxu0 %v1829
    %1988 = vmatpush1.msra.mxu0 %v1835
    %1989 = vmatprep.subr.mxu0 0.0
    %1990 = vmatpush1.msra.mxu0 0.0
    %1991 = vmatprep.subr.mxu0 0.0
    %1992 = vmatpush1.msra.mxu0 0.0
    %1993 = vmatprep.subr.mxu0 0.0
    %1994 = vmatpush1.msra.mxu0 0.0
    %1995 = vmatprep.subr.mxu0 0.0
    %1996 = vmatpush1.msra.mxu0 0.0
    %1997 = vmatprep.subr.mxu0 0.0
    %1998 = vmatpush1.msra.mxu0 0.0
    %1999 = vmatprep.subr.mxu0 0.0
    %2000 = vmatpush1.msra.mxu0 0.0
    %2001 = vmatprep.subr.mxu0 0.0
    %2002 = vmatpush1.msra.mxu0 0.0
    %2003 = vmatprep.subr.mxu0 0.0
    %2004 = vmatpush1.msra.mxu0 0.0
    %2005 = vmatprep.subr.mxu0 0.0
    %2006 = vmatpush1.msra.mxu0 0.0
    %2007 = vmatprep.subr.mxu0 0.0
    %2008 = vmatpush1.msra.mxu0 0.0
    %2009 = vmatprep.subr.mxu0 0.0
    %2010 = vmatpush1.msra.mxu0 0.0
    %2011 = vmatprep.subr.mxu0 0.0
    %2012 = vmatpush1.msra.mxu0 0.0
    %2013 = vmatprep.subr.mxu0 0.0
    %2014 = vmatpush1.msra.mxu0 0.0
    %2015 = vmatprep.subr.mxu0 0.0
    %2016 = vmatpush1.msra.mxu0 0.0
    %2017 = vmatprep.subr.mxu0 0.0
    %2018 = vmatpush1.msra.mxu0 0.0
    %2019 = vmatprep.subr.mxu0 0.0
    %2020 = vmatpush1.msra.mxu0 0.0
    %2021 = vmatprep.subr.mxu0 0.0
    %2022 = vmatpush1.msra.mxu0 0.0
    %2023 = vmatprep.subr.mxu0 0.0
    %2024 = vmatpush1.msra.mxu0 0.0
    %2025 = vmatprep.subr.mxu0 0.0
    %2026 = vmatpush1.msra.mxu0 0.0
    %2027 = vmatprep.subr.mxu0 0.0
    %2028 = vmatpush1.msra.mxu0 0.0
    %2029 = vmatprep.subr.mxu0 0.0
    %2030 = vmatpush1.msra.mxu0 0.0
    %2031 = vmatprep.subr.mxu0 0.0
    %2032 = vmatpush1.msra.mxu0 0.0
    %2033 = vmatprep.subr.mxu0 0.0
    %2034 = vmatpush1.msra.mxu0 0.0
    %2035 = vmatprep.subr.mxu0 0.0
    %2036 = vmatpush1.msra.mxu0 0.0
    %2037 = vmatprep.subr.mxu0 0.0
    %2038 = vmatpush1.msra.mxu0 0.0
    %2039 = vmatprep.subr.mxu0 0.0
    %2040 = vmatpush1.msra.mxu0 0.0
    %2041 = vmatprep.subr.mxu0 0.0
    %2042 = vmatpush1.msra.mxu0 0.0
    %2043 = vmatprep.subr.mxu0 0.0
    %2044 = vmatpush1.msra.mxu0 0.0
    %2045 = vmatprep.subr.mxu0 0.0
    %2046 = vmatpush1.msra.mxu0 0.0
    %2047 = vmatprep.subr.mxu0 0.0
    %2048 = vmatpush1.msra.mxu0 0.0
    %2049 = vmatprep.subr.mxu0 0.0
    %2050 = vmatpush1.msra.mxu0 0.0
    %2051 = vmatprep.mubr.f32.mxu0 0.0
    %2052 = vmatmul.mubr.f32.gmra.mrb[0].mxu0 %v1843
    %v2053 = vpop.f32.mrb[0].mxu0
    %v2054 = vadd.f32 0.0, %v2053
    %v2055 = vpop.f32.mrb[0].mxu0
    %v2056 = vadd.f32 0.0, %v2055
    %2057 = vdwg.mxu0
    %v2058 = vadd.f32 %v1810, %v1912
    %v2059 = vadd.f32 %v1811, %v1914
    %v2060 = vadd.f32 %v1812, %v1983
    %v2061 = vadd.f32 %v1813, %v1985
    %v2062 = vadd.f32 %v1814, %v2054
    %v2063 = vadd.f32 %v1815, %v2056
    %s2064 = scalar_lea.vmem %s0, 64
    %v2065 = vld [vmem:[%s2064] sm:$0xff]
    %2066 = vrot.lane.b32.xlu0 %v105, 90
    %v2067 = vpop.permute.xlu0 %2066
    %2068 = vrot.lane.b32.xlu0 %v106, 90
    %v2069 = vpop.permute.xlu0 %2068
    %2070 = vrot.lane.b32.xlu0 %v107, 90
    %v2071 = vpop.permute.xlu0 %2070
    %2072 = vrot.lane.b32.xlu0 %v108, 90
    %v2073 = vpop.permute.xlu0 %2072
    %2074 = vrot.lane.b32.xlu0 %v109, 90
    %v2075 = vpop.permute.xlu0 %2074
    %2076 = vrot.lane.b32.xlu0 %v110, 90
    %v2077 = vpop.permute.xlu0 %2076
    %vm2078 = vcmask 736256
    %v2079 = vsel %vm2078, %v2067, %v2069
    %v2080 = vsel %vm2078, %v2069, %v2071
    %v2081 = vsel %vm2078, %v2071, %v2073
    %v2082 = vsel %vm2078, %v2073, %v2075
    %v2083 = vsel %vm2078, %v2075, %v2077
    %v2091 = vsel %vm143, %v2065, 0
    %2093 = vmatprep.subr.mxu0 %v2080
    %2094 = vmatpush1.msra.mxu0 %v2079
    %2095 = vmatprep.subr.mxu0 0.0
    %2096 = vmatpush1.msra.mxu0 0.0
    %2097 = vmatprep.subr.mxu0 0.0
    %2098 = vmatpush1.msra.mxu0 0.0
    %2099 = vmatprep.subr.mxu0 0.0
    %2100 = vmatpush1.msra.mxu0 0.0
    %2101 = vmatprep.subr.mxu0 0.0
    %2102 = vmatpush1.msra.mxu0 0.0
    %2103 = vmatprep.subr.mxu0 0.0
    %2104 = vmatpush1.msra.mxu0 0.0
    %2105 = vmatprep.subr.mxu0 0.0
    %2106 = vmatpush1.msra.mxu0 0.0
    %2107 = vmatprep.subr.mxu0 0.0
    %2108 = vmatpush1.msra.mxu0 0.0
    %2109 = vmatprep.subr.mxu0 0.0
    %2110 = vmatpush1.msra.mxu0 0.0
    %2111 = vmatprep.subr.mxu0 0.0
    %2112 = vmatpush1.msra.mxu0 0.0
    %2113 = vmatprep.subr.mxu0 0.0
    %2114 = vmatpush1.msra.mxu0 0.0
    %2115 = vmatprep.subr.mxu0 0.0
    %2116 = vmatpush1.msra.mxu0 0.0
    %2117 = vmatprep.subr.mxu0 0.0
    %2118 = vmatpush1.msra.mxu0 0.0
    %2119 = vmatprep.subr.mxu0 0.0
    %2120 = vmatpush1.msra.mxu0 0.0
    %2121 = vmatprep.subr.mxu0 0.0
    %2122 = vmatpush1.msra.mxu0 0.0
    %2123 = vmatprep.subr.mxu0 0.0
    %2124 = vmatpush1.msra.mxu0 0.0
    %2125 = vmatprep.subr.mxu0 0.0
    %2126 = vmatpush1.msra.mxu0 0.0
    %2127 = vmatprep.subr.mxu0 0.0
    %2128 = vmatpush1.msra.mxu0 0.0
    %2129 = vmatprep.subr.mxu0 0.0
    %2130 = vmatpush1.msra.mxu0 0.0
    %2131 = vmatprep.subr.mxu0 0.0
    %2132 = vmatpush1.msra.mxu0 0.0
    %2133 = vmatprep.subr.mxu0 0.0
    %2134 = vmatpush1.msra.mxu0 0.0
    %2135 = vmatprep.subr.mxu0 0.0
    %2136 = vmatpush1.msra.mxu0 0.0
    %2137 = vmatprep.subr.mxu0 0.0
    %2138 = vmatpush1.msra.mxu0 0.0
    %2139 = vmatprep.subr.mxu0 0.0
    %2140 = vmatpush1.msra.mxu0 0.0
    %2141 = vmatprep.subr.mxu0 0.0
    %2142 = vmatpush1.msra.mxu0 0.0
    %2143 = vmatprep.subr.mxu0 0.0
    %2144 = vmatpush1.msra.mxu0 0.0
    %2145 = vmatprep.subr.mxu0 0.0
    %2146 = vmatpush1.msra.mxu0 0.0
    %2147 = vmatprep.subr.mxu0 0.0
    %2148 = vmatpush1.msra.mxu0 0.0
    %2149 = vmatprep.subr.mxu0 0.0
    %2150 = vmatpush1.msra.mxu0 0.0
    %2151 = vmatprep.subr.mxu0 0.0
    %2152 = vmatpush1.msra.mxu0 0.0
    %2153 = vmatprep.subr.mxu0 0.0
    %2154 = vmatpush1.msra.mxu0 0.0
    %2155 = vmatprep.subr.mxu0 0.0
    %2156 = vmatpush1.msra.mxu0 0.0
    %2157 = vmatprep.mubr.f32.mxu0 0.0
    %2158 = vmatmul.mubr.f32.gmra.mrb[0].mxu0 %v2091
    %v2159 = vpop.f32.mrb[0].mxu0
    %v2160 = vadd.f32 0.0, %v2159
    %v2161 = vpop.f32.mrb[0].mxu0
    %v2162 = vadd.f32 0.0, %v2161
    %2163 = vdwg.mxu0
    %2164 = vmatprep.subr.mxu0 %v2082
    %2165 = vmatpush1.msra.mxu0 %v2081
    %2166 = vmatprep.subr.mxu0 0.0
    %2167 = vmatpush1.msra.mxu0 0.0
    %2168 = vmatprep.subr.mxu0 0.0
    %2169 = vmatpush1.msra.mxu0 0.0
    %2170 = vmatprep.subr.mxu0 0.0
    %2171 = vmatpush1.msra.mxu0 0.0
    %2172 = vmatprep.subr.mxu0 0.0
    %2173 = vmatpush1.msra.mxu0 0.0
    %2174 = vmatprep.subr.mxu0 0.0
    %2175 = vmatpush1.msra.mxu0 0.0
    %2176 = vmatprep.subr.mxu0 0.0
    %2177 = vmatpush1.msra.mxu0 0.0
    %2178 = vmatprep.subr.mxu0 0.0
    %2179 = vmatpush1.msra.mxu0 0.0
    %2180 = vmatprep.subr.mxu0 0.0
    %2181 = vmatpush1.msra.mxu0 0.0
    %2182 = vmatprep.subr.mxu0 0.0
    %2183 = vmatpush1.msra.mxu0 0.0
    %2184 = vmatprep.subr.mxu0 0.0
    %2185 = vmatpush1.msra.mxu0 0.0
    %2186 = vmatprep.subr.mxu0 0.0
    %2187 = vmatpush1.msra.mxu0 0.0
    %2188 = vmatprep.subr.mxu0 0.0
    %2189 = vmatpush1.msra.mxu0 0.0
    %2190 = vmatprep.subr.mxu0 0.0
    %2191 = vmatpush1.msra.mxu0 0.0
    %2192 = vmatprep.subr.mxu0 0.0
    %2193 = vmatpush1.msra.mxu0 0.0
    %2194 = vmatprep.subr.mxu0 0.0
    %2195 = vmatpush1.msra.mxu0 0.0
    %2196 = vmatprep.subr.mxu0 0.0
    %2197 = vmatpush1.msra.mxu0 0.0
    %2198 = vmatprep.subr.mxu0 0.0
    %2199 = vmatpush1.msra.mxu0 0.0
    %2200 = vmatprep.subr.mxu0 0.0
    %2201 = vmatpush1.msra.mxu0 0.0
    %2202 = vmatprep.subr.mxu0 0.0
    %2203 = vmatpush1.msra.mxu0 0.0
    %2204 = vmatprep.subr.mxu0 0.0
    %2205 = vmatpush1.msra.mxu0 0.0
    %2206 = vmatprep.subr.mxu0 0.0
    %2207 = vmatpush1.msra.mxu0 0.0
    %2208 = vmatprep.subr.mxu0 0.0
    %2209 = vmatpush1.msra.mxu0 0.0
    %2210 = vmatprep.subr.mxu0 0.0
    %2211 = vmatpush1.msra.mxu0 0.0
    %2212 = vmatprep.subr.mxu0 0.0
    %2213 = vmatpush1.msra.mxu0 0.0
    %2214 = vmatprep.subr.mxu0 0.0
    %2215 = vmatpush1.msra.mxu0 0.0
    %2216 = vmatprep.subr.mxu0 0.0
    %2217 = vmatpush1.msra.mxu0 0.0
    %2218 = vmatprep.subr.mxu0 0.0
    %2219 = vmatpush1.msra.mxu0 0.0
    %2220 = vmatprep.subr.mxu0 0.0
    %2221 = vmatpush1.msra.mxu0 0.0
    %2222 = vmatprep.subr.mxu0 0.0
    %2223 = vmatpush1.msra.mxu0 0.0
    %2224 = vmatprep.subr.mxu0 0.0
    %2225 = vmatpush1.msra.mxu0 0.0
    %2226 = vmatprep.subr.mxu0 0.0
    %2227 = vmatpush1.msra.mxu0 0.0
    %2228 = vmatprep.mubr.f32.mxu0 0.0
    %2229 = vmatmul.mubr.f32.gmra.mrb[0].mxu0 %v2091
    %v2230 = vpop.f32.mrb[0].mxu0
    %v2231 = vadd.f32 0.0, %v2230
    %v2232 = vpop.f32.mrb[0].mxu0
    %v2233 = vadd.f32 0.0, %v2232
    %2234 = vdwg.mxu0
    %2235 = vmatprep.subr.mxu0 %v2077
    %2236 = vmatpush1.msra.mxu0 %v2083
    %2237 = vmatprep.subr.mxu0 0.0
    %2238 = vmatpush1.msra.mxu0 0.0
    %2239 = vmatprep.subr.mxu0 0.0
    %2240 = vmatpush1.msra.mxu0 0.0
    %2241 = vmatprep.subr.mxu0 0.0
    %2242 = vmatpush1.msra.mxu0 0.0
    %2243 = vmatprep.subr.mxu0 0.0
    %2244 = vmatpush1.msra.mxu0 0.0
    %2245 = vmatprep.subr.mxu0 0.0
    %2246 = vmatpush1.msra.mxu0 0.0
    %2247 = vmatprep.subr.mxu0 0.0
    %2248 = vmatpush1.msra.mxu0 0.0
    %2249 = vmatprep.subr.mxu0 0.0
    %2250 = vmatpush1.msra.mxu0 0.0
    %2251 = vmatprep.subr.mxu0 0.0
    %2252 = vmatpush1.msra.mxu0 0.0
    %2253 = vmatprep.subr.mxu0 0.0
    %2254 = vmatpush1.msra.mxu0 0.0
    %2255 = vmatprep.subr.mxu0 0.0
    %2256 = vmatpush1.msra.mxu0 0.0
    %2257 = vmatprep.subr.mxu0 0.0
    %2258 = vmatpush1.msra.mxu0 0.0
    %2259 = vmatprep.subr.mxu0 0.0
    %2260 = vmatpush1.msra.mxu0 0.0
    %2261 = vmatprep.subr.mxu0 0.0
    %2262 = vmatpush1.msra.mxu0 0.0
    %2263 = vmatprep.subr.mxu0 0.0
    %2264 = vmatpush1.msra.mxu0 0.0
    %2265 = vmatprep.subr.mxu0 0.0
    %2266 = vmatpush1.msra.mxu0 0.0
    %2267 = vmatprep.subr.mxu0 0.0
    %2268 = vmatpush1.msra.mxu0 0.0
    %2269 = vmatprep.subr.mxu0 0.0
    %2270 = vmatpush1.msra.mxu0 0.0
    %2271 = vmatprep.subr.mxu0 0.0
    %2272 = vmatpush1.msra.mxu0 0.0
    %2273 = vmatprep.subr.mxu0 0.0
    %2274 = vmatpush1.msra.mxu0 0.0
    %2275 = vmatprep.subr.mxu0 0.0
    %2276 = vmatpush1.msra.mxu0 0.0
    %2277 = vmatprep.subr.mxu0 0.0
    %2278 = vmatpush1.msra.mxu0 0.0
    %2279 = vmatprep.subr.mxu0 0.0
    %2280 = vmatpush1.msra.mxu0 0.0
    %2281 = vmatprep.subr.mxu0 0.0
    %2282 = vmatpush1.msra.mxu0 0.0
    %2283 = vmatprep.subr.mxu0 0.0
    %2284 = vmatpush1.msra.mxu0 0.0
    %2285 = vmatprep.subr.mxu0 0.0
    %2286 = vmatpush1.msra.mxu0 0.0
    %2287 = vmatprep.subr.mxu0 0.0
    %2288 = vmatpush1.msra.mxu0 0.0
    %2289 = vmatprep.subr.mxu0 0.0
    %2290 = vmatpush1.msra.mxu0 0.0
    %2291 = vmatprep.subr.mxu0 0.0
    %2292 = vmatpush1.msra.mxu0 0.0
    %2293 = vmatprep.subr.mxu0 0.0
    %2294 = vmatpush1.msra.mxu0 0.0
    %2295 = vmatprep.subr.mxu0 0.0
    %2296 = vmatpush1.msra.mxu0 0.0
    %2297 = vmatprep.subr.mxu0 0.0
    %2298 = vmatpush1.msra.mxu0 0.0
    %2299 = vmatprep.mubr.f32.mxu0 0.0
    %2300 = vmatmul.mubr.f32.gmra.mrb[0].mxu0 %v2091
    %v2301 = vpop.f32.mrb[0].mxu0
    %v2302 = vadd.f32 0.0, %v2301
    %v2303 = vpop.f32.mrb[0].mxu0
    %v2304 = vadd.f32 0.0, %v2303
    %2305 = vdwg.mxu0
    %v2306 = vadd.f32 %v2058, %v2160
    %v2307 = vadd.f32 %v2059, %v2162
    %v2308 = vadd.f32 %v2060, %v2231
    %v2309 = vadd.f32 %v2061, %v2233
    %v2310 = vadd.f32 %v2062, %v2302
    %v2311 = vadd.f32 %v2063, %v2304
    %v2312 = vld [vmem:[%s1] sm:$0xff]
    %2314 = vset.pattern.permute.xlu0 0
    %2315 = vperm.xlu0 %2314, %v2312
    %v2316 = vpop.permute.xlu0 %2315
    %v2318 = vadd.f32 %v2306, %v2316
    %v2319 = vadd.f32 %v2307, %v2316
    %v2320 = vadd.f32 %v2308, %v2316
    %v2321 = vadd.f32 %v2309, %v2316
    %v2322 = vadd.f32 %v2310, %v2316
    %v2323 = vadd.f32 %v2311, %v2316
    %v2324 = vmax.f32 %v2318, 0.0
    %v2325 = vmax.f32 %v2319, 0.0
    %v2326 = vmax.f32 %v2320, 0.0
    %v2327 = vmax.f32 %v2321, 0.0
    %v2328 = vmax.f32 %v2322, 0.0
    %v2329 = vmax.f32 %v2323, 0.0
    %2330 = vst [vmem:[%s4] sm:$0xff] %v2324
    %2331 = vst [vmem:[%s4 + $0x8] sm:$0xff] %v2325
    %2332 = vst [vmem:[%s4 + $0x10] sm:$0xff] %v2326
    %2333 = vst [vmem:[%s4 + $0x18] sm:$0xff] %v2327
    %2334 = vst [vmem:[%s4 + $0x20] sm:$0xff] %v2328
    %2335 = vst.msk [vmem:[%s4 + $0x28] sm:$0xff] %vm143, %v2329
    // Predicated region
    $region14: #{conv_mode_forward.2} parent=1 // pred_check
      _
    $region15: #{conv_mode_forward.2} parent=1 // pred_check_branch
      %2337 = sbr.rel (0) target = $region17
    $region16: #{conv_mode_forward.2} parent=1 // pred_region
      _
    $region17: #{conv_mode_forward.2} parent=1 // pred_fallthru
      _
    // Predicated region
    $region18: #{conv_mode_forward.2} parent=1 // pred_check
      _
    $region19: #{conv_mode_forward.2} parent=1 // pred_check_branch
      %2339 = sbr.rel (0) target = $region21
    $region20: #{conv_mode_forward.2} parent=1 // pred_region
      _
    $region21: #{conv_mode_forward.2} parent=1 // pred_fallthru
      _

</llo_original>
